<compile_context>
chip_gen: v6e
topology: v6e:2x2x1
jax: 0.10.0
libtpu: 0.0.40
codegen_flags: <defaults>
</compile_context>

<pallas_src>
import functools

import numpy as np
import jax
import jax.numpy as jnp
from jax import lax
from jax.experimental import pallas as pl
from jax.experimental.pallas import tpu as pltpu

ALPHA = 2.0
_BIG = 1e30  # finite sentinel >> max possible squared distance (safe in f32 for any sane H, W)


def _hausdorff_kernel(crow_ref, ccol_ref, rows_ref, cols_ref, out_ref, *,
                      alpha, b_blk, n, chunk, unroll):
    """One grid step: B_BLK batch elements, fused streaming EDT + loss partial sum."""
    big = jnp.float32(_BIG)
    num_chunks = n // chunk

    # Lane-form pixel coordinates (constant block, fetched once for the whole grid).
    yj = crow_ref[0:1, :]                      # (1, N)
    xj = crow_ref[1:2, :]                      # (1, N)

    # ---- #1: single fused streaming pass over row-chunks of the (virtual) pairwise
    # squared-distance matrix, with running (1, N) min accumulators per batch:
    #   *_f : distance^2 to nearest background pixel (masked-out rows = foreground)
    #   *_b : distance^2 to nearest foreground pixel (masked-out rows = background)
    def chunk_body(c, accs):
        i0 = pl.multiple_of(c * chunk, chunk)
        cc = ccol_ref[pl.ds(i0, chunk), :]     # (chunk, 2) sublane-form coords
        yi = cc[:, 0:1]                        # (chunk, 1)
        xi = cc[:, 1:2]
        dy = yi - yj
        dx = xi - xj
        d2c = dy * dy + dx * dx                # (chunk, N) generated dist2 tile (#5)

        new_accs = []
        for b in range(b_blk):                 # static, small (#2)
            mc = cols_ref[b, pl.ds(i0, chunk), :]   # (chunk, 2): pred / target values
            p_fg = mc[:, 0:1] > 0.5            # (chunk, 1) foreground row masks
            t_fg = mc[:, 1:2] > 0.5
            p_f, p_b, t_f, t_b = accs[b]
            p_f = jnp.minimum(p_f, jnp.min(jnp.where(p_fg, big, d2c), axis=0, keepdims=True))
            p_b = jnp.minimum(p_b, jnp.min(jnp.where(p_fg, d2c, big), axis=0, keepdims=True))
            t_f = jnp.minimum(t_f, jnp.min(jnp.where(t_fg, big, d2c), axis=0, keepdims=True))
            t_b = jnp.minimum(t_b, jnp.min(jnp.where(t_fg, d2c, big), axis=0, keepdims=True))
            new_accs.append((p_f, p_b, t_f, t_b))
        return tuple(new_accs)

    init = tuple(
        tuple(jnp.full((1, n), _BIG, jnp.float32) for _ in range(4))
        for _ in range(b_blk))
    accs = lax.fori_loop(0, num_chunks, chunk_body, init, unroll=unroll)

    # ---- Lane-dense epilogue: (1, N) per batch, summed into one scalar per block.
    block_sum = jnp.float32(0.0)
    for b in range(b_blk):
        rows = rows_ref[b]                     # (2, N)
        p_row = rows[0:1, :]
        t_row = rows[1:2, :]
        p_f, p_b, t_f, t_b = accs[b]

        # #8: empty-side clamp. A mask side with no pixels leaves its min at the
        # sentinel; clamping it to 0 reproduces the reference's field == 0 for an
        # empty foreground (the fg-side min is already 0 everywhere in that case),
        # so no any-foreground cross-lane reduce is needed.
        # TODO(synk): an all-foreground image (no background pixel) is also clamped
        # to 0, which differs from scipy's edt for that degenerate case.
        p_fc = jnp.where(p_f >= big, 0.0, p_f)
        p_bc = jnp.where(p_b >= big, 0.0, p_b)
        t_fc = jnp.where(t_f >= big, 0.0, t_f)
        t_bc = jnp.where(t_b >= big, 0.0, t_b)

        if alpha == 2.0:
            # dt^2 = fg + bg + 2*sqrt(fg*bg): one EUP sqrt, no sqrt-then-square (#8).
            p_d = p_fc + p_bc + 2.0 * jnp.sqrt(p_fc * p_bc)
            t_d = t_fc + t_bc + 2.0 * jnp.sqrt(t_fc * t_bc)
        else:
            p_d = jnp.power(jnp.sqrt(p_fc) + jnp.sqrt(p_bc), alpha)
            t_d = jnp.power(jnp.sqrt(t_fc) + jnp.sqrt(t_bc), alpha)

        err = p_row - t_row
        block_sum = block_sum + jnp.sum(err * err * (p_d + t_d))

    # Lane-dense partial-sum write; wrapper reads lane 0 per block and sums.
    out_ref[...] = jnp.broadcast_to(block_sum, out_ref.shape).astype(jnp.float32)


def _largest_batch_block(b):
    """Largest divisor of b that keeps >= 2 grid steps (v7x megacore, #2/#7)."""
    if b <= 1:
        return 1
    best = 1
    for d in range(1, b + 1):
        if b % d == 0 and b // d >= 2:
            best = d
    return best


def _pick_chunk(n):
    for c in (32, 16, 8, 4, 2):
        if n % c == 0:
            return c
    return 1


def _round_up(x, m):
    return ((x + m - 1) // m) * m


def hausdorff_dt_loss(pred, target, alpha=ALPHA):
    assert pred.ndim == 4, "Only 2D (B, 1, H, W) supported in this kernel"
    assert pred.shape == target.shape
    B, C, H, W = pred.shape
    assert C == 1, "binary (single-channel) inputs expected"
    N = H * W

    b_blk = _largest_batch_block(B)
    num_blocks = B // b_blk
    chunk = _pick_chunk(N)
    num_chunks = N // chunk
    unroll = True if num_chunks <= 16 else 8   # bound trace size at large spatial sizes

    # Tiny compile-time constant coordinate tables (exact small ints in f32); the
    # (N, N) pairwise-distance matrix itself is never materialized (#5).
    ys, xs = np.meshgrid(np.arange(H, dtype=np.float32),
                         np.arange(W, dtype=np.float32), indexing="ij")
    coords = np.stack([ys.ravel(), xs.ravel()], axis=0)            # (2, N)
    crow = jnp.asarray(coords, dtype=jnp.float32)                  # lane form    (2, N)
    ccol = jnp.asarray(np.ascontiguousarray(coords.T), jnp.float32)  # sublane form (N, 2)

    p = pred.reshape(B, 1, N).astype(jnp.float32)
    t = target.reshape(B, 1, N).astype(jnp.float32)
    rows = jnp.concatenate([p, t], axis=1)                         # (B, 2, N) lane-dense values
    cols = jnp.stack([p[:, 0, :], t[:, 0, :]], axis=-1)            # (B, N, 2) sublane-form masks
    # TODO(synk): deriving `cols` in-kernel from `rows` via an XLU transpose would drop
    # this lane-padded input entirely (review #6); kept host-side for lowering safety.

    kernel = functools.partial(_hausdorff_kernel, alpha=alpha, b_blk=b_blk,
                               n=N, chunk=chunk, unroll=unroll)

    # #4: explicit VMEM budget from the real (padded, double-buffered) block sizes.
    blk_words = (
        _round_up(2, 8) * _round_up(N, 128)                 # crow (constant, fetched once)
        + _round_up(N, 8) * _round_up(2, 128)               # ccol (constant, fetched once)
        + b_blk * _round_up(2, 8) * _round_up(N, 128)       # rows block
        + b_blk * _round_up(N, 8) * _round_up(2, 128)       # cols block
        + _round_up(1, 8) * 128)                            # out block
    vmem_limit = int(min(64 * 1024 * 1024,
                         max(16 * 1024 * 1024, 3 * 4 * blk_words)))

    partials = pl.pallas_call(
        kernel,
        out_shape=jax.ShapeDtypeStruct((num_blocks, 1, 128), jnp.float32),
        grid_spec=pltpu.PrefetchScalarGridSpec(
            num_scalar_prefetch=0,
            grid=(num_blocks,),
            in_specs=[
                pl.BlockSpec((2, N), lambda g: (0, 0)),            # coords, lane form (constant)
                pl.BlockSpec((N, 2), lambda g: (0, 0)),            # coords, sublane form (constant)
                pl.BlockSpec((b_blk, 2, N), lambda g: (g, 0, 0)),  # pred/target rows
                pl.BlockSpec((b_blk, N, 2), lambda g: (g, 0, 0)),  # pred/target columns (masks)
            ],
            out_specs=pl.BlockSpec((1, 1, 128), lambda g: (g, 0, 0)),
        ),
        compiler_params=pltpu.CompilerParams(
            # Independent per-block partial sums.  "parallel" only helps on v7x
            # megacore (#7); in-kernel batch blocking is the lever on v5e/v6e.
            dimension_semantics=("parallel",),
            vmem_limit_bytes=vmem_limit,
        ),
    )(crow, ccol, rows, cols)

    total = jnp.sum(partials[:, 0, 0])
    return total / (B * C * H * W)


def _reference_loss(pred, target, alpha=ALPHA):
    """Pure-numpy reference with brute-force exact EDT (same math as scipy edt)."""
    B, C, H, W = pred.shape
    ys, xs = np.meshgrid(np.arange(H), np.arange(W), indexing="ij")
    coords = np.stack([ys.ravel(), xs.ravel()], axis=-1).astype(np.float32)   # (N, 2)
    d2 = ((coords[:, None, :] - coords[None, :, :]) ** 2).sum(-1)             # (N, N)

    def field(img2d):
        fg = img2d.reshape(-1) > 0.5
        if not fg.any():
            return np.zeros(H * W, np.float32)
        fgd = np.sqrt(np.min(np.where(fg[None, :], np.inf, d2), axis=1))
        bgd = np.sqrt(np.min(np.where(fg[None, :], d2, np.inf), axis=1))
        return (fgd + bgd).astype(np.float32)

    total = 0.0
    for b in range(B):
        pdt = field(pred[b, 0])
        tdt = field(target[b, 0])
        err = (pred[b, 0].reshape(-1) - target[b, 0].reshape(-1)) ** 2
        total += float((err * (pdt ** alpha + tdt ** alpha)).sum())
    return total / pred.size


if __name__ == "__main__":
    key = jax.random.PRNGKey(0)
    k1, k2 = jax.random.split(key)
    # pred: sigmoid-like probabilities in [0, 1]; target: binary mask
    pred = jax.random.uniform(k1, (2, 1, 16, 16), dtype=jnp.float32)
    target = (jax.random.uniform(k2, (2, 1, 16, 16)) > 0.5).astype(jnp.float32)

    loss = jax.block_until_ready(hausdorff_dt_loss(pred, target))

    expected = _reference_loss(np.asarray(pred), np.asarray(target))
    assert np.isfinite(float(loss))
    assert np.allclose(float(loss), expected, rtol=1e-4, atol=1e-5), (float(loss), expected)

    print("KERNEL_OK")
</pallas_src>

<mosaic_0001>
module attributes {stable_mosaic.version = 11 : i64} {
  func.func @_hausdorff_kernel(%arg0: i32, %arg1: memref<2x256xf32, #tpu.memory_space<vmem>>, %arg2: memref<256x2xf32, #tpu.memory_space<vmem>>, %arg3: memref<1x2x256xf32, #tpu.memory_space<vmem>>, %arg4: memref<1x256x2xf32, #tpu.memory_space<vmem>>, %arg5: memref<1x1x128xf32, #tpu.memory_space<vmem>>) attributes {dimension_semantics = [#tpu.dimension_semantics<parallel>], iteration_bounds = array<i64: 2>, scalar_prefetch = 0 : i64, scratch_operands = 0 : i64, tpu.core_type = #tpu.core_type<tc>, window_params = [{pipeline_mode = #tpu.pipeline_mode<synchronous>, transform_indices = @transform_0, window_bounds = array<i64: 2, 256>}, {pipeline_mode = #tpu.pipeline_mode<synchronous>, transform_indices = @transform_1, window_bounds = array<i64: 256, 2>}, {transform_indices = @transform_2, window_bounds = array<i64: 1, 2, 256>}, {transform_indices = @transform_3, window_bounds = array<i64: 1, 256, 2>}, {transform_indices = @transform_4, window_bounds = array<i64: 1, 1, 128>}]} {
    %c0 = arith.constant 0 : index
    %c0_0 = arith.constant 0 : index
    %0 = vector.load %arg1[%c0, %c0_0] : memref<2x256xf32, #tpu.memory_space<vmem>>, vector<1x256xf32>
    %c1 = arith.constant 1 : index
    %c0_1 = arith.constant 0 : index
    %1 = vector.load %arg1[%c1, %c0_1] : memref<2x256xf32, #tpu.memory_space<vmem>>, vector<1x256xf32>
    %cst = arith.constant 1.000000e+30 : f32
    %2 = vector.broadcast %cst : f32 to vector<1x256xf32>
    %cst_2 = arith.constant 1.000000e+30 : f32
    %3 = vector.broadcast %cst_2 : f32 to vector<1x256xf32>
    %cst_3 = arith.constant 1.000000e+30 : f32
    %4 = vector.broadcast %cst_3 : f32 to vector<1x256xf32>
    %cst_4 = arith.constant 1.000000e+30 : f32
    %5 = vector.broadcast %cst_4 : f32 to vector<1x256xf32>
    %cst_5 = arith.constant 1.000000e+30 : f32
    %c0_i32 = arith.constant 0 : i32
    %c32_i32 = arith.constant 32 : i32
    %6 = arith.muli %c0_i32, %c32_i32 : i32
    %7 = tpu.assume_multiple %6, 32 : i32
    %8 = arith.index_cast %7 : i32 to index
    %c0_6 = arith.constant 0 : index
    %9 = vector.load %arg2[%8, %c0_6] : memref<256x2xf32, #tpu.memory_space<vmem>>, vector<32x2xf32>
    %10 = vector.extract_strided_slice %9 {offsets = [0, 0], sizes = [32, 1], strides = [1, 1]} : vector<32x2xf32> to vector<32x1xf32>
    %11 = vector.extract_strided_slice %9 {offsets = [0, 1], sizes = [32, 1], strides = [1, 1]} : vector<32x2xf32> to vector<32x1xf32>
    %12 = vector.broadcast %10 : vector<32x1xf32> to vector<32x256xf32>
    %13 = vector.broadcast %0 : vector<1x256xf32> to vector<32x256xf32>
    %14 = arith.subf %12, %13 : vector<32x256xf32>
    %15 = vector.broadcast %11 : vector<32x1xf32> to vector<32x256xf32>
    %16 = vector.broadcast %1 : vector<1x256xf32> to vector<32x256xf32>
    %17 = arith.subf %15, %16 : vector<32x256xf32>
    %18 = arith.mulf %14, %14 : vector<32x256xf32>
    %19 = arith.mulf %17, %17 : vector<32x256xf32>
    %20 = arith.addf %18, %19 : vector<32x256xf32>
    %c0_7 = arith.constant 0 : index
    %21 = arith.index_cast %7 : i32 to index
    %c0_8 = arith.constant 0 : index
    %22 = vector.load %arg4[%c0_7, %21, %c0_8] : memref<1x256x2xf32, #tpu.memory_space<vmem>>, vector<1x32x2xf32>
    %23 = vector.shape_cast %22 : vector<1x32x2xf32> to vector<32x2xf32>
    %24 = vector.extract_strided_slice %23 {offsets = [0, 0], sizes = [32, 1], strides = [1, 1]} : vector<32x2xf32> to vector<32x1xf32>
    %cst_9 = arith.constant 5.000000e-01 : f32
    %25 = vector.broadcast %cst_9 : f32 to vector<32x1xf32>
    %26 = arith.cmpf ogt, %24, %25 : vector<32x1xf32>
    %27 = vector.extract_strided_slice %23 {offsets = [0, 1], sizes = [32, 1], strides = [1, 1]} : vector<32x2xf32> to vector<32x1xf32>
    %cst_10 = arith.constant 5.000000e-01 : f32
    %28 = vector.broadcast %cst_10 : f32 to vector<32x1xf32>
    %29 = arith.cmpf ogt, %27, %28 : vector<32x1xf32>
    %30 = vector.shape_cast %26 : vector<32x1xi1> to vector<32x1xi1>
    %31 = vector.broadcast %30 : vector<32x1xi1> to vector<32x256xi1>
    %32 = vector.broadcast %cst_5 : f32 to vector<32x256xf32>
    %33 = arith.select %31, %32, %20 : vector<32x256xi1>, vector<32x256xf32>
    %cst_11 = arith.constant dense<0x7F800000> : vector<256xf32>
    %34 = vector.multi_reduction <minimumf>, %33, %cst_11 [0] : vector<32x256xf32> to vector<256xf32>
    %35 = vector.shape_cast %34 : vector<256xf32> to vector<1x256xf32>
    %36 = arith.minimumf %2, %35 : vector<1x256xf32>
    %37 = vector.shape_cast %26 : vector<32x1xi1> to vector<32x1xi1>
    %38 = vector.broadcast %37 : vector<32x1xi1> to vector<32x256xi1>
    %39 = vector.broadcast %cst_5 : f32 to vector<32x256xf32>
    %40 = arith.select %38, %20, %39 : vector<32x256xi1>, vector<32x256xf32>
    %cst_12 = arith.constant dense<0x7F800000> : vector<256xf32>
    %41 = vector.multi_reduction <minimumf>, %40, %cst_12 [0] : vector<32x256xf32> to vector<256xf32>
    %42 = vector.shape_cast %41 : vector<256xf32> to vector<1x256xf32>
    %43 = arith.minimumf %3, %42 : vector<1x256xf32>
    %44 = vector.shape_cast %29 : vector<32x1xi1> to vector<32x1xi1>
    %45 = vector.broadcast %44 : vector<32x1xi1> to vector<32x256xi1>
    %46 = vector.broadcast %cst_5 : f32 to vector<32x256xf32>
    %47 = arith.select %45, %46, %20 : vector<32x256xi1>, vector<32x256xf32>
    %cst_13 = arith.constant dense<0x7F800000> : vector<256xf32>
    %48 = vector.multi_reduction <minimumf>, %47, %cst_13 [0] : vector<32x256xf32> to vector<256xf32>
    %49 = vector.shape_cast %48 : vector<256xf32> to vector<1x256xf32>
    %50 = arith.minimumf %4, %49 : vector<1x256xf32>
    %51 = vector.shape_cast %29 : vector<32x1xi1> to vector<32x1xi1>
    %52 = vector.broadcast %51 : vector<32x1xi1> to vector<32x256xi1>
    %53 = vector.broadcast %cst_5 : f32 to vector<32x256xf32>
    %54 = arith.select %52, %20, %53 : vector<32x256xi1>, vector<32x256xf32>
    %cst_14 = arith.constant dense<0x7F800000> : vector<256xf32>
    %55 = vector.multi_reduction <minimumf>, %54, %cst_14 [0] : vector<32x256xf32> to vector<256xf32>
    %56 = vector.shape_cast %55 : vector<256xf32> to vector<1x256xf32>
    %57 = arith.minimumf %5, %56 : vector<1x256xf32>
    %c1_i32 = arith.constant 1 : i32
    %c32_i32_15 = arith.constant 32 : i32
    %58 = arith.muli %c1_i32, %c32_i32_15 : i32
    %59 = tpu.assume_multiple %58, 32 : i32
    %60 = arith.index_cast %59 : i32 to index
    %c0_16 = arith.constant 0 : index
    %61 = vector.load %arg2[%60, %c0_16] : memref<256x2xf32, #tpu.memory_space<vmem>>, vector<32x2xf32>
    %62 = vector.extract_strided_slice %61 {offsets = [0, 0], sizes = [32, 1], strides = [1, 1]} : vector<32x2xf32> to vector<32x1xf32>
    %63 = vector.extract_strided_slice %61 {offsets = [0, 1], sizes = [32, 1], strides = [1, 1]} : vector<32x2xf32> to vector<32x1xf32>
    %64 = vector.broadcast %62 : vector<32x1xf32> to vector<32x256xf32>
    %65 = vector.broadcast %0 : vector<1x256xf32> to vector<32x256xf32>
    %66 = arith.subf %64, %65 : vector<32x256xf32>
    %67 = vector.broadcast %63 : vector<32x1xf32> to vector<32x256xf32>
    %68 = vector.broadcast %1 : vector<1x256xf32> to vector<32x256xf32>
    %69 = arith.subf %67, %68 : vector<32x256xf32>
    %70 = arith.mulf %66, %66 : vector<32x256xf32>
    %71 = arith.mulf %69, %69 : vector<32x256xf32>
    %72 = arith.addf %70, %71 : vector<32x256xf32>
    %c0_17 = arith.constant 0 : index
    %73 = arith.index_cast %59 : i32 to index
    %c0_18 = arith.constant 0 : index
    %74 = vector.load %arg4[%c0_17, %73, %c0_18] : memref<1x256x2xf32, #tpu.memory_space<vmem>>, vector<1x32x2xf32>
    %75 = vector.shape_cast %74 : vector<1x32x2xf32> to vector<32x2xf32>
    %76 = vector.extract_strided_slice %75 {offsets = [0, 0], sizes = [32, 1], strides = [1, 1]} : vector<32x2xf32> to vector<32x1xf32>
    %cst_19 = arith.constant 5.000000e-01 : f32
    %77 = vector.broadcast %cst_19 : f32 to vector<32x1xf32>
    %78 = arith.cmpf ogt, %76, %77 : vector<32x1xf32>
    %79 = vector.extract_strided_slice %75 {offsets = [0, 1], sizes = [32, 1], strides = [1, 1]} : vector<32x2xf32> to vector<32x1xf32>
    %cst_20 = arith.constant 5.000000e-01 : f32
    %80 = vector.broadcast %cst_20 : f32 to vector<32x1xf32>
    %81 = arith.cmpf ogt, %79, %80 : vector<32x1xf32>
    %82 = vector.shape_cast %78 : vector<32x1xi1> to vector<32x1xi1>
    %83 = vector.broadcast %82 : vector<32x1xi1> to vector<32x256xi1>
    %84 = vector.broadcast %cst_5 : f32 to vector<32x256xf32>
    %85 = arith.select %83, %84, %72 : vector<32x256xi1>, vector<32x256xf32>
    %cst_21 = arith.constant dense<0x7F800000> : vector<256xf32>
    %86 = vector.multi_reduction <minimumf>, %85, %cst_21 [0] : vector<32x256xf32> to vector<256xf32>
    %87 = vector.shape_cast %86 : vector<256xf32> to vector<1x256xf32>
    %88 = arith.minimumf %36, %87 : vector<1x256xf32>
    %89 = vector.shape_cast %78 : vector<32x1xi1> to vector<32x1xi1>
    %90 = vector.broadcast %89 : vector<32x1xi1> to vector<32x256xi1>
    %91 = vector.broadcast %cst_5 : f32 to vector<32x256xf32>
    %92 = arith.select %90, %72, %91 : vector<32x256xi1>, vector<32x256xf32>
    %cst_22 = arith.constant dense<0x7F800000> : vector<256xf32>
    %93 = vector.multi_reduction <minimumf>, %92, %cst_22 [0] : vector<32x256xf32> to vector<256xf32>
    %94 = vector.shape_cast %93 : vector<256xf32> to vector<1x256xf32>
    %95 = arith.minimumf %43, %94 : vector<1x256xf32>
    %96 = vector.shape_cast %81 : vector<32x1xi1> to vector<32x1xi1>
    %97 = vector.broadcast %96 : vector<32x1xi1> to vector<32x256xi1>
    %98 = vector.broadcast %cst_5 : f32 to vector<32x256xf32>
    %99 = arith.select %97, %98, %72 : vector<32x256xi1>, vector<32x256xf32>
    %cst_23 = arith.constant dense<0x7F800000> : vector<256xf32>
    %100 = vector.multi_reduction <minimumf>, %99, %cst_23 [0] : vector<32x256xf32> to vector<256xf32>
    %101 = vector.shape_cast %100 : vector<256xf32> to vector<1x256xf32>
    %102 = arith.minimumf %50, %101 : vector<1x256xf32>
    %103 = vector.shape_cast %81 : vector<32x1xi1> to vector<32x1xi1>
    %104 = vector.broadcast %103 : vector<32x1xi1> to vector<32x256xi1>
    %105 = vector.broadcast %cst_5 : f32 to vector<32x256xf32>
    %106 = arith.select %104, %72, %105 : vector<32x256xi1>, vector<32x256xf32>
    %cst_24 = arith.constant dense<0x7F800000> : vector<256xf32>
    %107 = vector.multi_reduction <minimumf>, %106, %cst_24 [0] : vector<32x256xf32> to vector<256xf32>
    %108 = vector.shape_cast %107 : vector<256xf32> to vector<1x256xf32>
    %109 = arith.minimumf %57, %108 : vector<1x256xf32>
    %c2_i32 = arith.constant 2 : i32
    %c32_i32_25 = arith.constant 32 : i32
    %110 = arith.muli %c2_i32, %c32_i32_25 : i32
    %111 = tpu.assume_multiple %110, 32 : i32
    %112 = arith.index_cast %111 : i32 to index
    %c0_26 = arith.constant 0 : index
    %113 = vector.load %arg2[%112, %c0_26] : memref<256x2xf32, #tpu.memory_space<vmem>>, vector<32x2xf32>
    %114 = vector.extract_strided_slice %113 {offsets = [0, 0], sizes = [32, 1], strides = [1, 1]} : vector<32x2xf32> to vector<32x1xf32>
    %115 = vector.extract_strided_slice %113 {offsets = [0, 1], sizes = [32, 1], strides = [1, 1]} : vector<32x2xf32> to vector<32x1xf32>
    %116 = vector.broadcast %114 : vector<32x1xf32> to vector<32x256xf32>
    %117 = vector.broadcast %0 : vector<1x256xf32> to vector<32x256xf32>
    %118 = arith.subf %116, %117 : vector<32x256xf32>
    %119 = vector.broadcast %115 : vector<32x1xf32> to vector<32x256xf32>
    %120 = vector.broadcast %1 : vector<1x256xf32> to vector<32x256xf32>
    %121 = arith.subf %119, %120 : vector<32x256xf32>
    %122 = arith.mulf %118, %118 : vector<32x256xf32>
    %123 = arith.mulf %121, %121 : vector<32x256xf32>
    %124 = arith.addf %122, %123 : vector<32x256xf32>
    %c0_27 = arith.constant 0 : index
    %125 = arith.index_cast %111 : i32 to index
    %c0_28 = arith.constant 0 : index
    %126 = vector.load %arg4[%c0_27, %125, %c0_28] : memref<1x256x2xf32, #tpu.memory_space<vmem>>, vector<1x32x2xf32>
    %127 = vector.shape_cast %126 : vector<1x32x2xf32> to vector<32x2xf32>
    %128 = vector.extract_strided_slice %127 {offsets = [0, 0], sizes = [32, 1], strides = [1, 1]} : vector<32x2xf32> to vector<32x1xf32>
    %cst_29 = arith.constant 5.000000e-01 : f32
    %129 = vector.broadcast %cst_29 : f32 to vector<32x1xf32>
    %130 = arith.cmpf ogt, %128, %129 : vector<32x1xf32>
    %131 = vector.extract_strided_slice %127 {offsets = [0, 1], sizes = [32, 1], strides = [1, 1]} : vector<32x2xf32> to vector<32x1xf32>
    %cst_30 = arith.constant 5.000000e-01 : f32
    %132 = vector.broadcast %cst_30 : f32 to vector<32x1xf32>
    %133 = arith.cmpf ogt, %131, %132 : vector<32x1xf32>
    %134 = vector.shape_cast %130 : vector<32x1xi1> to vector<32x1xi1>
    %135 = vector.broadcast %134 : vector<32x1xi1> to vector<32x256xi1>
    %136 = vector.broadcast %cst_5 : f32 to vector<32x256xf32>
    %137 = arith.select %135, %136, %124 : vector<32x256xi1>, vector<32x256xf32>
    %cst_31 = arith.constant dense<0x7F800000> : vector<256xf32>
    %138 = vector.multi_reduction <minimumf>, %137, %cst_31 [0] : vector<32x256xf32> to vector<256xf32>
    %139 = vector.shape_cast %138 : vector<256xf32> to vector<1x256xf32>
    %140 = arith.minimumf %88, %139 : vector<1x256xf32>
    %141 = vector.shape_cast %130 : vector<32x1xi1> to vector<32x1xi1>
    %142 = vector.broadcast %141 : vector<32x1xi1> to vector<32x256xi1>
    %143 = vector.broadcast %cst_5 : f32 to vector<32x256xf32>
    %144 = arith.select %142, %124, %143 : vector<32x256xi1>, vector<32x256xf32>
    %cst_32 = arith.constant dense<0x7F800000> : vector<256xf32>
    %145 = vector.multi_reduction <minimumf>, %144, %cst_32 [0] : vector<32x256xf32> to vector<256xf32>
    %146 = vector.shape_cast %145 : vector<256xf32> to vector<1x256xf32>
    %147 = arith.minimumf %95, %146 : vector<1x256xf32>
    %148 = vector.shape_cast %133 : vector<32x1xi1> to vector<32x1xi1>
    %149 = vector.broadcast %148 : vector<32x1xi1> to vector<32x256xi1>
    %150 = vector.broadcast %cst_5 : f32 to vector<32x256xf32>
    %151 = arith.select %149, %150, %124 : vector<32x256xi1>, vector<32x256xf32>
    %cst_33 = arith.constant dense<0x7F800000> : vector<256xf32>
    %152 = vector.multi_reduction <minimumf>, %151, %cst_33 [0] : vector<32x256xf32> to vector<256xf32>
    %153 = vector.shape_cast %152 : vector<256xf32> to vector<1x256xf32>
    %154 = arith.minimumf %102, %153 : vector<1x256xf32>
    %155 = vector.shape_cast %133 : vector<32x1xi1> to vector<32x1xi1>
    %156 = vector.broadcast %155 : vector<32x1xi1> to vector<32x256xi1>
    %157 = vector.broadcast %cst_5 : f32 to vector<32x256xf32>
    %158 = arith.select %156, %124, %157 : vector<32x256xi1>, vector<32x256xf32>
    %cst_34 = arith.constant dense<0x7F800000> : vector<256xf32>
    %159 = vector.multi_reduction <minimumf>, %158, %cst_34 [0] : vector<32x256xf32> to vector<256xf32>
    %160 = vector.shape_cast %159 : vector<256xf32> to vector<1x256xf32>
    %161 = arith.minimumf %109, %160 : vector<1x256xf32>
    %c3_i32 = arith.constant 3 : i32
    %c32_i32_35 = arith.constant 32 : i32
    %162 = arith.muli %c3_i32, %c32_i32_35 : i32
    %163 = tpu.assume_multiple %162, 32 : i32
    %164 = arith.index_cast %163 : i32 to index
    %c0_36 = arith.constant 0 : index
    %165 = vector.load %arg2[%164, %c0_36] : memref<256x2xf32, #tpu.memory_space<vmem>>, vector<32x2xf32>
    %166 = vector.extract_strided_slice %165 {offsets = [0, 0], sizes = [32, 1], strides = [1, 1]} : vector<32x2xf32> to vector<32x1xf32>
    %167 = vector.extract_strided_slice %165 {offsets = [0, 1], sizes = [32, 1], strides = [1, 1]} : vector<32x2xf32> to vector<32x1xf32>
    %168 = vector.broadcast %166 : vector<32x1xf32> to vector<32x256xf32>
    %169 = vector.broadcast %0 : vector<1x256xf32> to vector<32x256xf32>
    %170 = arith.subf %168, %169 : vector<32x256xf32>
    %171 = vector.broadcast %167 : vector<32x1xf32> to vector<32x256xf32>
    %172 = vector.broadcast %1 : vector<1x256xf32> to vector<32x256xf32>
    %173 = arith.subf %171, %172 : vector<32x256xf32>
    %174 = arith.mulf %170, %170 : vector<32x256xf32>
    %175 = arith.mulf %173, %173 : vector<32x256xf32>
    %176 = arith.addf %174, %175 : vector<32x256xf32>
    %c0_37 = arith.constant 0 : index
    %177 = arith.index_cast %163 : i32 to index
    %c0_38 = arith.constant 0 : index
    %178 = vector.load %arg4[%c0_37, %177, %c0_38] : memref<1x256x2xf32, #tpu.memory_space<vmem>>, vector<1x32x2xf32>
    %179 = vector.shape_cast %178 : vector<1x32x2xf32> to vector<32x2xf32>
    %180 = vector.extract_strided_slice %179 {offsets = [0, 0], sizes = [32, 1], strides = [1, 1]} : vector<32x2xf32> to vector<32x1xf32>
    %cst_39 = arith.constant 5.000000e-01 : f32
    %181 = vector.broadcast %cst_39 : f32 to vector<32x1xf32>
    %182 = arith.cmpf ogt, %180, %181 : vector<32x1xf32>
    %183 = vector.extract_strided_slice %179 {offsets = [0, 1], sizes = [32, 1], strides = [1, 1]} : vector<32x2xf32> to vector<32x1xf32>
    %cst_40 = arith.constant 5.000000e-01 : f32
    %184 = vector.broadcast %cst_40 : f32 to vector<32x1xf32>
    %185 = arith.cmpf ogt, %183, %184 : vector<32x1xf32>
    %186 = vector.shape_cast %182 : vector<32x1xi1> to vector<32x1xi1>
    %187 = vector.broadcast %186 : vector<32x1xi1> to vector<32x256xi1>
    %188 = vector.broadcast %cst_5 : f32 to vector<32x256xf32>
    %189 = arith.select %187, %188, %176 : vector<32x256xi1>, vector<32x256xf32>
    %cst_41 = arith.constant dense<0x7F800000> : vector<256xf32>
    %190 = vector.multi_reduction <minimumf>, %189, %cst_41 [0] : vector<32x256xf32> to vector<256xf32>
    %191 = vector.shape_cast %190 : vector<256xf32> to vector<1x256xf32>
    %192 = arith.minimumf %140, %191 : vector<1x256xf32>
    %193 = vector.shape_cast %182 : vector<32x1xi1> to vector<32x1xi1>
    %194 = vector.broadcast %193 : vector<32x1xi1> to vector<32x256xi1>
    %195 = vector.broadcast %cst_5 : f32 to vector<32x256xf32>
    %196 = arith.select %194, %176, %195 : vector<32x256xi1>, vector<32x256xf32>
    %cst_42 = arith.constant dense<0x7F800000> : vector<256xf32>
    %197 = vector.multi_reduction <minimumf>, %196, %cst_42 [0] : vector<32x256xf32> to vector<256xf32>
    %198 = vector.shape_cast %197 : vector<256xf32> to vector<1x256xf32>
    %199 = arith.minimumf %147, %198 : vector<1x256xf32>
    %200 = vector.shape_cast %185 : vector<32x1xi1> to vector<32x1xi1>
    %201 = vector.broadcast %200 : vector<32x1xi1> to vector<32x256xi1>
    %202 = vector.broadcast %cst_5 : f32 to vector<32x256xf32>
    %203 = arith.select %201, %202, %176 : vector<32x256xi1>, vector<32x256xf32>
    %cst_43 = arith.constant dense<0x7F800000> : vector<256xf32>
    %204 = vector.multi_reduction <minimumf>, %203, %cst_43 [0] : vector<32x256xf32> to vector<256xf32>
    %205 = vector.shape_cast %204 : vector<256xf32> to vector<1x256xf32>
    %206 = arith.minimumf %154, %205 : vector<1x256xf32>
    %207 = vector.shape_cast %185 : vector<32x1xi1> to vector<32x1xi1>
    %208 = vector.broadcast %207 : vector<32x1xi1> to vector<32x256xi1>
    %209 = vector.broadcast %cst_5 : f32 to vector<32x256xf32>
    %210 = arith.select %208, %176, %209 : vector<32x256xi1>, vector<32x256xf32>
    %cst_44 = arith.constant dense<0x7F800000> : vector<256xf32>
    %211 = vector.multi_reduction <minimumf>, %210, %cst_44 [0] : vector<32x256xf32> to vector<256xf32>
    %212 = vector.shape_cast %211 : vector<256xf32> to vector<1x256xf32>
    %213 = arith.minimumf %161, %212 : vector<1x256xf32>
    %c4_i32 = arith.constant 4 : i32
    %c32_i32_45 = arith.constant 32 : i32
    %214 = arith.muli %c4_i32, %c32_i32_45 : i32
    %215 = tpu.assume_multiple %214, 32 : i32
    %216 = arith.index_cast %215 : i32 to index
    %c0_46 = arith.constant 0 : index
    %217 = vector.load %arg2[%216, %c0_46] : memref<256x2xf32, #tpu.memory_space<vmem>>, vector<32x2xf32>
    %218 = vector.extract_strided_slice %217 {offsets = [0, 0], sizes = [32, 1], strides = [1, 1]} : vector<32x2xf32> to vector<32x1xf32>
    %219 = vector.extract_strided_slice %217 {offsets = [0, 1], sizes = [32, 1], strides = [1, 1]} : vector<32x2xf32> to vector<32x1xf32>
    %220 = vector.broadcast %218 : vector<32x1xf32> to vector<32x256xf32>
    %221 = vector.broadcast %0 : vector<1x256xf32> to vector<32x256xf32>
    %222 = arith.subf %220, %221 : vector<32x256xf32>
    %223 = vector.broadcast %219 : vector<32x1xf32> to vector<32x256xf32>
    %224 = vector.broadcast %1 : vector<1x256xf32> to vector<32x256xf32>
    %225 = arith.subf %223, %224 : vector<32x256xf32>
    %226 = arith.mulf %222, %222 : vector<32x256xf32>
    %227 = arith.mulf %225, %225 : vector<32x256xf32>
    %228 = arith.addf %226, %227 : vector<32x256xf32>
    %c0_47 = arith.constant 0 : index
    %229 = arith.index_cast %215 : i32 to index
    %c0_48 = arith.constant 0 : index
    %230 = vector.load %arg4[%c0_47, %229, %c0_48] : memref<1x256x2xf32, #tpu.memory_space<vmem>>, vector<1x32x2xf32>
    %231 = vector.shape_cast %230 : vector<1x32x2xf32> to vector<32x2xf32>
    %232 = vector.extract_strided_slice %231 {offsets = [0, 0], sizes = [32, 1], strides = [1, 1]} : vector<32x2xf32> to vector<32x1xf32>
    %cst_49 = arith.constant 5.000000e-01 : f32
    %233 = vector.broadcast %cst_49 : f32 to vector<32x1xf32>
    %234 = arith.cmpf ogt, %232, %233 : vector<32x1xf32>
    %235 = vector.extract_strided_slice %231 {offsets = [0, 1], sizes = [32, 1], strides = [1, 1]} : vector<32x2xf32> to vector<32x1xf32>
    %cst_50 = arith.constant 5.000000e-01 : f32
    %236 = vector.broadcast %cst_50 : f32 to vector<32x1xf32>
    %237 = arith.cmpf ogt, %235, %236 : vector<32x1xf32>
    %238 = vector.shape_cast %234 : vector<32x1xi1> to vector<32x1xi1>
    %239 = vector.broadcast %238 : vector<32x1xi1> to vector<32x256xi1>
    %240 = vector.broadcast %cst_5 : f32 to vector<32x256xf32>
    %241 = arith.select %239, %240, %228 : vector<32x256xi1>, vector<32x256xf32>
    %cst_51 = arith.constant dense<0x7F800000> : vector<256xf32>
    %242 = vector.multi_reduction <minimumf>, %241, %cst_51 [0] : vector<32x256xf32> to vector<256xf32>
    %243 = vector.shape_cast %242 : vector<256xf32> to vector<1x256xf32>
    %244 = arith.minimumf %192, %243 : vector<1x256xf32>
    %245 = vector.shape_cast %234 : vector<32x1xi1> to vector<32x1xi1>
    %246 = vector.broadcast %245 : vector<32x1xi1> to vector<32x256xi1>
    %247 = vector.broadcast %cst_5 : f32 to vector<32x256xf32>
    %248 = arith.select %246, %228, %247 : vector<32x256xi1>, vector<32x256xf32>
    %cst_52 = arith.constant dense<0x7F800000> : vector<256xf32>
    %249 = vector.multi_reduction <minimumf>, %248, %cst_52 [0] : vector<32x256xf32> to vector<256xf32>
    %250 = vector.shape_cast %249 : vector<256xf32> to vector<1x256xf32>
    %251 = arith.minimumf %199, %250 : vector<1x256xf32>
    %252 = vector.shape_cast %237 : vector<32x1xi1> to vector<32x1xi1>
    %253 = vector.broadcast %252 : vector<32x1xi1> to vector<32x256xi1>
    %254 = vector.broadcast %cst_5 : f32 to vector<32x256xf32>
    %255 = arith.select %253, %254, %228 : vector<32x256xi1>, vector<32x256xf32>
    %cst_53 = arith.constant dense<0x7F800000> : vector<256xf32>
    %256 = vector.multi_reduction <minimumf>, %255, %cst_53 [0] : vector<32x256xf32> to vector<256xf32>
    %257 = vector.shape_cast %256 : vector<256xf32> to vector<1x256xf32>
    %258 = arith.minimumf %206, %257 : vector<1x256xf32>
    %259 = vector.shape_cast %237 : vector<32x1xi1> to vector<32x1xi1>
    %260 = vector.broadcast %259 : vector<32x1xi1> to vector<32x256xi1>
    %261 = vector.broadcast %cst_5 : f32 to vector<32x256xf32>
    %262 = arith.select %260, %228, %261 : vector<32x256xi1>, vector<32x256xf32>
    %cst_54 = arith.constant dense<0x7F800000> : vector<256xf32>
    %263 = vector.multi_reduction <minimumf>, %262, %cst_54 [0] : vector<32x256xf32> to vector<256xf32>
    %264 = vector.shape_cast %263 : vector<256xf32> to vector<1x256xf32>
    %265 = arith.minimumf %213, %264 : vector<1x256xf32>
    %c5_i32 = arith.constant 5 : i32
    %c32_i32_55 = arith.constant 32 : i32
    %266 = arith.muli %c5_i32, %c32_i32_55 : i32
    %267 = tpu.assume_multiple %266, 32 : i32
    %268 = arith.index_cast %267 : i32 to index
    %c0_56 = arith.constant 0 : index
    %269 = vector.load %arg2[%268, %c0_56] : memref<256x2xf32, #tpu.memory_space<vmem>>, vector<32x2xf32>
    %270 = vector.extract_strided_slice %269 {offsets = [0, 0], sizes = [32, 1], strides = [1, 1]} : vector<32x2xf32> to vector<32x1xf32>
    %271 = vector.extract_strided_slice %269 {offsets = [0, 1], sizes = [32, 1], strides = [1, 1]} : vector<32x2xf32> to vector<32x1xf32>
    %272 = vector.broadcast %270 : vector<32x1xf32> to vector<32x256xf32>
    %273 = vector.broadcast %0 : vector<1x256xf32> to vector<32x256xf32>
    %274 = arith.subf %272, %273 : vector<32x256xf32>
    %275 = vector.broadcast %271 : vector<32x1xf32> to vector<32x256xf32>
    %276 = vector.broadcast %1 : vector<1x256xf32> to vector<32x256xf32>
    %277 = arith.subf %275, %276 : vector<32x256xf32>
    %278 = arith.mulf %274, %274 : vector<32x256xf32>
    %279 = arith.mulf %277, %277 : vector<32x256xf32>
    %280 = arith.addf %278, %279 : vector<32x256xf32>
    %c0_57 = arith.constant 0 : index
    %281 = arith.index_cast %267 : i32 to index
    %c0_58 = arith.constant 0 : index
    %282 = vector.load %arg4[%c0_57, %281, %c0_58] : memref<1x256x2xf32, #tpu.memory_space<vmem>>, vector<1x32x2xf32>
    %283 = vector.shape_cast %282 : vector<1x32x2xf32> to vector<32x2xf32>
    %284 = vector.extract_strided_slice %283 {offsets = [0, 0], sizes = [32, 1], strides = [1, 1]} : vector<32x2xf32> to vector<32x1xf32>
    %cst_59 = arith.constant 5.000000e-01 : f32
    %285 = vector.broadcast %cst_59 : f32 to vector<32x1xf32>
    %286 = arith.cmpf ogt, %284, %285 : vector<32x1xf32>
    %287 = vector.extract_strided_slice %283 {offsets = [0, 1], sizes = [32, 1], strides = [1, 1]} : vector<32x2xf32> to vector<32x1xf32>
    %cst_60 = arith.constant 5.000000e-01 : f32
    %288 = vector.broadcast %cst_60 : f32 to vector<32x1xf32>
    %289 = arith.cmpf ogt, %287, %288 : vector<32x1xf32>
    %290 = vector.shape_cast %286 : vector<32x1xi1> to vector<32x1xi1>
    %291 = vector.broadcast %290 : vector<32x1xi1> to vector<32x256xi1>
    %292 = vector.broadcast %cst_5 : f32 to vector<32x256xf32>
    %293 = arith.select %291, %292, %280 : vector<32x256xi1>, vector<32x256xf32>
    %cst_61 = arith.constant dense<0x7F800000> : vector<256xf32>
    %294 = vector.multi_reduction <minimumf>, %293, %cst_61 [0] : vector<32x256xf32> to vector<256xf32>
    %295 = vector.shape_cast %294 : vector<256xf32> to vector<1x256xf32>
    %296 = arith.minimumf %244, %295 : vector<1x256xf32>
    %297 = vector.shape_cast %286 : vector<32x1xi1> to vector<32x1xi1>
    %298 = vector.broadcast %297 : vector<32x1xi1> to vector<32x256xi1>
    %299 = vector.broadcast %cst_5 : f32 to vector<32x256xf32>
    %300 = arith.select %298, %280, %299 : vector<32x256xi1>, vector<32x256xf32>
    %cst_62 = arith.constant dense<0x7F800000> : vector<256xf32>
    %301 = vector.multi_reduction <minimumf>, %300, %cst_62 [0] : vector<32x256xf32> to vector<256xf32>
    %302 = vector.shape_cast %301 : vector<256xf32> to vector<1x256xf32>
    %303 = arith.minimumf %251, %302 : vector<1x256xf32>
    %304 = vector.shape_cast %289 : vector<32x1xi1> to vector<32x1xi1>
    %305 = vector.broadcast %304 : vector<32x1xi1> to vector<32x256xi1>
    %306 = vector.broadcast %cst_5 : f32 to vector<32x256xf32>
    %307 = arith.select %305, %306, %280 : vector<32x256xi1>, vector<32x256xf32>
    %cst_63 = arith.constant dense<0x7F800000> : vector<256xf32>
    %308 = vector.multi_reduction <minimumf>, %307, %cst_63 [0] : vector<32x256xf32> to vector<256xf32>
    %309 = vector.shape_cast %308 : vector<256xf32> to vector<1x256xf32>
    %310 = arith.minimumf %258, %309 : vector<1x256xf32>
    %311 = vector.shape_cast %289 : vector<32x1xi1> to vector<32x1xi1>
    %312 = vector.broadcast %311 : vector<32x1xi1> to vector<32x256xi1>
    %313 = vector.broadcast %cst_5 : f32 to vector<32x256xf32>
    %314 = arith.select %312, %280, %313 : vector<32x256xi1>, vector<32x256xf32>
    %cst_64 = arith.constant dense<0x7F800000> : vector<256xf32>
    %315 = vector.multi_reduction <minimumf>, %314, %cst_64 [0] : vector<32x256xf32> to vector<256xf32>
    %316 = vector.shape_cast %315 : vector<256xf32> to vector<1x256xf32>
    %317 = arith.minimumf %265, %316 : vector<1x256xf32>
    %c6_i32 = arith.constant 6 : i32
    %c32_i32_65 = arith.constant 32 : i32
    %318 = arith.muli %c6_i32, %c32_i32_65 : i32
    %319 = tpu.assume_multiple %318, 32 : i32
    %320 = arith.index_cast %319 : i32 to index
    %c0_66 = arith.constant 0 : index
    %321 = vector.load %arg2[%320, %c0_66] : memref<256x2xf32, #tpu.memory_space<vmem>>, vector<32x2xf32>
    %322 = vector.extract_strided_slice %321 {offsets = [0, 0], sizes = [32, 1], strides = [1, 1]} : vector<32x2xf32> to vector<32x1xf32>
    %323 = vector.extract_strided_slice %321 {offsets = [0, 1], sizes = [32, 1], strides = [1, 1]} : vector<32x2xf32> to vector<32x1xf32>
    %324 = vector.broadcast %322 : vector<32x1xf32> to vector<32x256xf32>
    %325 = vector.broadcast %0 : vector<1x256xf32> to vector<32x256xf32>
    %326 = arith.subf %324, %325 : vector<32x256xf32>
    %327 = vector.broadcast %323 : vector<32x1xf32> to vector<32x256xf32>
    %328 = vector.broadcast %1 : vector<1x256xf32> to vector<32x256xf32>
    %329 = arith.subf %327, %328 : vector<32x256xf32>
    %330 = arith.mulf %326, %326 : vector<32x256xf32>
    %331 = arith.mulf %329, %329 : vector<32x256xf32>
    %332 = arith.addf %330, %331 : vector<32x256xf32>
    %c0_67 = arith.constant 0 : index
    %333 = arith.index_cast %319 : i32 to index
    %c0_68 = arith.constant 0 : index
    %334 = vector.load %arg4[%c0_67, %333, %c0_68] : memref<1x256x2xf32, #tpu.memory_space<vmem>>, vector<1x32x2xf32>
    %335 = vector.shape_cast %334 : vector<1x32x2xf32> to vector<32x2xf32>
    %336 = vector.extract_strided_slice %335 {offsets = [0, 0], sizes = [32, 1], strides = [1, 1]} : vector<32x2xf32> to vector<32x1xf32>
    %cst_69 = arith.constant 5.000000e-01 : f32
    %337 = vector.broadcast %cst_69 : f32 to vector<32x1xf32>
    %338 = arith.cmpf ogt, %336, %337 : vector<32x1xf32>
    %339 = vector.extract_strided_slice %335 {offsets = [0, 1], sizes = [32, 1], strides = [1, 1]} : vector<32x2xf32> to vector<32x1xf32>
    %cst_70 = arith.constant 5.000000e-01 : f32
    %340 = vector.broadcast %cst_70 : f32 to vector<32x1xf32>
    %341 = arith.cmpf ogt, %339, %340 : vector<32x1xf32>
    %342 = vector.shape_cast %338 : vector<32x1xi1> to vector<32x1xi1>
    %343 = vector.broadcast %342 : vector<32x1xi1> to vector<32x256xi1>
    %344 = vector.broadcast %cst_5 : f32 to vector<32x256xf32>
    %345 = arith.select %343, %344, %332 : vector<32x256xi1>, vector<32x256xf32>
    %cst_71 = arith.constant dense<0x7F800000> : vector<256xf32>
    %346 = vector.multi_reduction <minimumf>, %345, %cst_71 [0] : vector<32x256xf32> to vector<256xf32>
    %347 = vector.shape_cast %346 : vector<256xf32> to vector<1x256xf32>
    %348 = arith.minimumf %296, %347 : vector<1x256xf32>
    %349 = vector.shape_cast %338 : vector<32x1xi1> to vector<32x1xi1>
    %350 = vector.broadcast %349 : vector<32x1xi1> to vector<32x256xi1>
    %351 = vector.broadcast %cst_5 : f32 to vector<32x256xf32>
    %352 = arith.select %350, %332, %351 : vector<32x256xi1>, vector<32x256xf32>
    %cst_72 = arith.constant dense<0x7F800000> : vector<256xf32>
    %353 = vector.multi_reduction <minimumf>, %352, %cst_72 [0] : vector<32x256xf32> to vector<256xf32>
    %354 = vector.shape_cast %353 : vector<256xf32> to vector<1x256xf32>
    %355 = arith.minimumf %303, %354 : vector<1x256xf32>
    %356 = vector.shape_cast %341 : vector<32x1xi1> to vector<32x1xi1>
    %357 = vector.broadcast %356 : vector<32x1xi1> to vector<32x256xi1>
    %358 = vector.broadcast %cst_5 : f32 to vector<32x256xf32>
    %359 = arith.select %357, %358, %332 : vector<32x256xi1>, vector<32x256xf32>
    %cst_73 = arith.constant dense<0x7F800000> : vector<256xf32>
    %360 = vector.multi_reduction <minimumf>, %359, %cst_73 [0] : vector<32x256xf32> to vector<256xf32>
    %361 = vector.shape_cast %360 : vector<256xf32> to vector<1x256xf32>
    %362 = arith.minimumf %310, %361 : vector<1x256xf32>
    %363 = vector.shape_cast %341 : vector<32x1xi1> to vector<32x1xi1>
    %364 = vector.broadcast %363 : vector<32x1xi1> to vector<32x256xi1>
    %365 = vector.broadcast %cst_5 : f32 to vector<32x256xf32>
    %366 = arith.select %364, %332, %365 : vector<32x256xi1>, vector<32x256xf32>
    %cst_74 = arith.constant dense<0x7F800000> : vector<256xf32>
    %367 = vector.multi_reduction <minimumf>, %366, %cst_74 [0] : vector<32x256xf32> to vector<256xf32>
    %368 = vector.shape_cast %367 : vector<256xf32> to vector<1x256xf32>
    %369 = arith.minimumf %317, %368 : vector<1x256xf32>
    %c7_i32 = arith.constant 7 : i32
    %c32_i32_75 = arith.constant 32 : i32
    %370 = arith.muli %c7_i32, %c32_i32_75 : i32
    %371 = tpu.assume_multiple %370, 32 : i32
    %372 = arith.index_cast %371 : i32 to index
    %c0_76 = arith.constant 0 : index
    %373 = vector.load %arg2[%372, %c0_76] : memref<256x2xf32, #tpu.memory_space<vmem>>, vector<32x2xf32>
    %374 = vector.extract_strided_slice %373 {offsets = [0, 0], sizes = [32, 1], strides = [1, 1]} : vector<32x2xf32> to vector<32x1xf32>
    %375 = vector.extract_strided_slice %373 {offsets = [0, 1], sizes = [32, 1], strides = [1, 1]} : vector<32x2xf32> to vector<32x1xf32>
    %376 = vector.broadcast %374 : vector<32x1xf32> to vector<32x256xf32>
    %377 = vector.broadcast %0 : vector<1x256xf32> to vector<32x256xf32>
    %378 = arith.subf %376, %377 : vector<32x256xf32>
    %379 = vector.broadcast %375 : vector<32x1xf32> to vector<32x256xf32>
    %380 = vector.broadcast %1 : vector<1x256xf32> to vector<32x256xf32>
    %381 = arith.subf %379, %380 : vector<32x256xf32>
    %382 = arith.mulf %378, %378 : vector<32x256xf32>
    %383 = arith.mulf %381, %381 : vector<32x256xf32>
    %384 = arith.addf %382, %383 : vector<32x256xf32>
    %c0_77 = arith.constant 0 : index
    %385 = arith.index_cast %371 : i32 to index
    %c0_78 = arith.constant 0 : index
    %386 = vector.load %arg4[%c0_77, %385, %c0_78] : memref<1x256x2xf32, #tpu.memory_space<vmem>>, vector<1x32x2xf32>
    %387 = vector.shape_cast %386 : vector<1x32x2xf32> to vector<32x2xf32>
    %388 = vector.extract_strided_slice %387 {offsets = [0, 0], sizes = [32, 1], strides = [1, 1]} : vector<32x2xf32> to vector<32x1xf32>
    %cst_79 = arith.constant 5.000000e-01 : f32
    %389 = vector.broadcast %cst_79 : f32 to vector<32x1xf32>
    %390 = arith.cmpf ogt, %388, %389 : vector<32x1xf32>
    %391 = vector.extract_strided_slice %387 {offsets = [0, 1], sizes = [32, 1], strides = [1, 1]} : vector<32x2xf32> to vector<32x1xf32>
    %cst_80 = arith.constant 5.000000e-01 : f32
    %392 = vector.broadcast %cst_80 : f32 to vector<32x1xf32>
    %393 = arith.cmpf ogt, %391, %392 : vector<32x1xf32>
    %394 = vector.shape_cast %390 : vector<32x1xi1> to vector<32x1xi1>
    %395 = vector.broadcast %394 : vector<32x1xi1> to vector<32x256xi1>
    %396 = vector.broadcast %cst_5 : f32 to vector<32x256xf32>
    %397 = arith.select %395, %396, %384 : vector<32x256xi1>, vector<32x256xf32>
    %cst_81 = arith.constant dense<0x7F800000> : vector<256xf32>
    %398 = vector.multi_reduction <minimumf>, %397, %cst_81 [0] : vector<32x256xf32> to vector<256xf32>
    %399 = vector.shape_cast %398 : vector<256xf32> to vector<1x256xf32>
    %400 = arith.minimumf %348, %399 : vector<1x256xf32>
    %401 = vector.shape_cast %390 : vector<32x1xi1> to vector<32x1xi1>
    %402 = vector.broadcast %401 : vector<32x1xi1> to vector<32x256xi1>
    %403 = vector.broadcast %cst_5 : f32 to vector<32x256xf32>
    %404 = arith.select %402, %384, %403 : vector<32x256xi1>, vector<32x256xf32>
    %cst_82 = arith.constant dense<0x7F800000> : vector<256xf32>
    %405 = vector.multi_reduction <minimumf>, %404, %cst_82 [0] : vector<32x256xf32> to vector<256xf32>
    %406 = vector.shape_cast %405 : vector<256xf32> to vector<1x256xf32>
    %407 = arith.minimumf %355, %406 : vector<1x256xf32>
    %408 = vector.shape_cast %393 : vector<32x1xi1> to vector<32x1xi1>
    %409 = vector.broadcast %408 : vector<32x1xi1> to vector<32x256xi1>
    %410 = vector.broadcast %cst_5 : f32 to vector<32x256xf32>
    %411 = arith.select %409, %410, %384 : vector<32x256xi1>, vector<32x256xf32>
    %cst_83 = arith.constant dense<0x7F800000> : vector<256xf32>
    %412 = vector.multi_reduction <minimumf>, %411, %cst_83 [0] : vector<32x256xf32> to vector<256xf32>
    %413 = vector.shape_cast %412 : vector<256xf32> to vector<1x256xf32>
    %414 = arith.minimumf %362, %413 : vector<1x256xf32>
    %415 = vector.shape_cast %393 : vector<32x1xi1> to vector<32x1xi1>
    %416 = vector.broadcast %415 : vector<32x1xi1> to vector<32x256xi1>
    %417 = vector.broadcast %cst_5 : f32 to vector<32x256xf32>
    %418 = arith.select %416, %384, %417 : vector<32x256xi1>, vector<32x256xf32>
    %cst_84 = arith.constant dense<0x7F800000> : vector<256xf32>
    %419 = vector.multi_reduction <minimumf>, %418, %cst_84 [0] : vector<32x256xf32> to vector<256xf32>
    %420 = vector.shape_cast %419 : vector<256xf32> to vector<1x256xf32>
    %421 = arith.minimumf %369, %420 : vector<1x256xf32>
    %c8_i32 = arith.constant 8 : i32
    %c0_85 = arith.constant 0 : index
    %c0_86 = arith.constant 0 : index
    %c0_87 = arith.constant 0 : index
    %422 = vector.load %arg3[%c0_85, %c0_86, %c0_87] : memref<1x2x256xf32, #tpu.memory_space<vmem>>, vector<1x2x256xf32>
    %423 = vector.shape_cast %422 : vector<1x2x256xf32> to vector<2x256xf32>
    %424 = vector.extract_strided_slice %423 {offsets = [0, 0], sizes = [1, 256], strides = [1, 1]} : vector<2x256xf32> to vector<1x256xf32>
    %425 = vector.extract_strided_slice %423 {offsets = [1, 0], sizes = [1, 256], strides = [1, 1]} : vector<2x256xf32> to vector<1x256xf32>
    %cst_88 = arith.constant 1.000000e+30 : f32
    %426 = vector.broadcast %cst_88 : f32 to vector<1x256xf32>
    %427 = arith.cmpf oge, %400, %426 : vector<1x256xf32>
    %cst_89 = arith.constant 0.000000e+00 : f32
    %428 = vector.broadcast %cst_89 : f32 to vector<1x256xf32>
    %429 = arith.select %427, %428, %400 : vector<1x256xi1>, vector<1x256xf32>
    %cst_90 = arith.constant 1.000000e+30 : f32
    %430 = vector.broadcast %cst_90 : f32 to vector<1x256xf32>
    %431 = arith.cmpf oge, %407, %430 : vector<1x256xf32>
    %cst_91 = arith.constant 0.000000e+00 : f32
    %432 = vector.broadcast %cst_91 : f32 to vector<1x256xf32>
    %433 = arith.select %431, %432, %407 : vector<1x256xi1>, vector<1x256xf32>
    %cst_92 = arith.constant 1.000000e+30 : f32
    %434 = vector.broadcast %cst_92 : f32 to vector<1x256xf32>
    %435 = arith.cmpf oge, %414, %434 : vector<1x256xf32>
    %cst_93 = arith.constant 0.000000e+00 : f32
    %436 = vector.broadcast %cst_93 : f32 to vector<1x256xf32>
    %437 = arith.select %435, %436, %414 : vector<1x256xi1>, vector<1x256xf32>
    %cst_94 = arith.constant 1.000000e+30 : f32
    %438 = vector.broadcast %cst_94 : f32 to vector<1x256xf32>
    %439 = arith.cmpf oge, %421, %438 : vector<1x256xf32>
    %cst_95 = arith.constant 0.000000e+00 : f32
    %440 = vector.broadcast %cst_95 : f32 to vector<1x256xf32>
    %441 = arith.select %439, %440, %421 : vector<1x256xi1>, vector<1x256xf32>
    %442 = arith.addf %429, %433 : vector<1x256xf32>
    %443 = arith.mulf %429, %433 : vector<1x256xf32>
    %444 = math.sqrt %443 : vector<1x256xf32>
    %cst_96 = arith.constant 2.000000e+00 : f32
    %445 = vector.broadcast %cst_96 : f32 to vector<1x256xf32>
    %446 = arith.mulf %445, %444 : vector<1x256xf32>
    %447 = arith.addf %442, %446 : vector<1x256xf32>
    %448 = arith.addf %437, %441 : vector<1x256xf32>
    %449 = arith.mulf %437, %441 : vector<1x256xf32>
    %450 = math.sqrt %449 : vector<1x256xf32>
    %cst_97 = arith.constant 2.000000e+00 : f32
    %451 = vector.broadcast %cst_97 : f32 to vector<1x256xf32>
    %452 = arith.mulf %451, %450 : vector<1x256xf32>
    %453 = arith.addf %448, %452 : vector<1x256xf32>
    %454 = arith.subf %424, %425 : vector<1x256xf32>
    %455 = arith.mulf %454, %454 : vector<1x256xf32>
    %456 = arith.addf %447, %453 : vector<1x256xf32>
    %457 = arith.mulf %455, %456 : vector<1x256xf32>
    %458 = vector.shape_cast %457 : vector<1x256xf32> to vector<1x1x256xf32>
    %cst_98 = arith.constant dense<0.000000e+00> : vector<1xf32>
    %459 = vector.multi_reduction <add>, %458, %cst_98 [1, 2] : vector<1x1x256xf32> to vector<1xf32>
    %460 = vector.shape_cast %459 : vector<1xf32> to vector<1x1x1xf32>
    %461 = vector.extract %460[0, 0, 0] : f32 from vector<1x1x1xf32>
    %cst_99 = arith.constant 0.000000e+00 : f32
    %462 = arith.addf %cst_99, %461 : f32
    %463 = vector.broadcast %462 : f32 to vector<1x1x128xf32>
    %c0_100 = arith.constant 0 : index
    %c0_101 = arith.constant 0 : index
    %c0_102 = arith.constant 0 : index
    %464 = vector.load %arg5[%c0_100, %c0_101, %c0_102] : memref<1x1x128xf32, #tpu.memory_space<vmem>>, vector<1x1x128xf32>
    tpu.vector_store %arg5[%c0_100, %c0_101, %c0_102], %463 {strides = array<i32>} : memref<1x1x128xf32, #tpu.memory_space<vmem>>, vector<1x1x128xf32>,
    return
  }
  func.func @transform_0(%arg0: i32) -> (i32, i32) {
    %c0_i32 = arith.constant 0 : i32
    %c0_i32_0 = arith.constant 0 : i32
    %c0_i32_1 = arith.constant 0 : i32
    return %c0_i32, %c0_i32_0 : i32, i32
  }
  func.func @transform_1(%arg0: i32) -> (i32, i32) {
    %c0_i32 = arith.constant 0 : i32
    %c0_i32_0 = arith.constant 0 : i32
    %c0_i32_1 = arith.constant 0 : i32
    return %c0_i32, %c0_i32_0 : i32, i32
  }
  func.func @transform_2(%arg0: i32) -> (i32, i32, i32) {
    %c0_i32 = arith.constant 0 : i32
    %c0_i32_0 = arith.constant 0 : i32
    %c0_i32_1 = arith.constant 0 : i32
    return %arg0, %c0_i32, %c0_i32_0 : i32, i32, i32
  }
  func.func @transform_3(%arg0: i32) -> (i32, i32, i32) {
    %c0_i32 = arith.constant 0 : i32
    %c0_i32_0 = arith.constant 0 : i32
    %c0_i32_1 = arith.constant 0 : i32
    return %arg0, %c0_i32, %c0_i32_0 : i32, i32, i32
  }
  func.func @transform_4(%arg0: i32) -> (i32, i32, i32) {
    %c0_i32 = arith.constant 0 : i32
    %c0_i32_0 = arith.constant 0 : i32
    %c0_i32_1 = arith.constant 0 : i32
    return %arg0, %c0_i32, %c0_i32_0 : i32, i32, i32
  }
}

</mosaic_0001>

<llo_original>
// kernel: tpu_custom_call.1
$region0: #{tpu_custom_call.1}
  #allocation0 [shape = 'u32[]', space=smem, size = 0x4, offset = 0x4, fixed_abs, tag = 'smem constant byte address 0x4 - core index']
  #allocation1 [shape = 'u32[144,128]{1,0:T(1,128)}', space=vmem, size = 0x12000, scoped, tag = 'internal scratch']
  %s0 = inlined_call_operand.vmem [shape: f32[2,256], index: 0, kind: input, shape index: {}]
  %s1 = inlined_call_operand.vmem [shape: f32[256,2], index: 1, kind: input, shape index: {}]
  %s2 = inlined_call_operand.vmem [shape: f32[2,2,256], index: 2, kind: input, shape index: {}]
  %s3 = inlined_call_operand.vmem [shape: f32[2,256,2], index: 3, kind: input, shape index: {}]
  %s4 = inlined_call_operand.hbm [shape: f32[2,1,128], index: 4, kind: output, shape index: {}]
  %s5 = sld [smem:[#allocation0]]
  $region49: #{tpu_custom_call.1} parent=0
    _
  %s7 = ssub.s32 1, %s5
  %s8 = scalar_select 0, %s7, %s5
  $region1: #{tpu_custom_call.1} parent=0
    #allocation2 [shape = 'u8[1024]{0}', space=vmem, size = 0x400, scoped, tag = 'output window, operand 0']
    #allocation3 [shape = 's32[2]{0}', space=sflag, size = 0x8, scoped, tag = 'scoped memory for tpu_custom_call.1']
    %9 = vsyncpa [#allocation3], 0
    %s10 = scalar_lea.sflag [#allocation3], 1
    %11 = vsyncpa %s10, 0
    loop: start=0, step=1, limit=4
    $region2: #{tpu_custom_call.1} parent=1 // loop_pre_header
      _
    $region3: #{tpu_custom_call.1} parent=1 // loop_header
      %s13 = sphi 0, %s17
      %p14 = scmp.ge.s32.totalorder %s13, 4
      %s21 = sphi 0, %s21
      %s23 = sphi 0, %s21
      %s24 = sphi 0, %s23
      %s38 = sphi 0, %s24
      %s42 = sphi 0, %s42
      %s44 = sphi 0, %s42
      %s45 = sphi 0, %s44
      %s59 = sphi 0, %s45
      %s65 = sphi 0, %s67
      %s68 = sphi 0, %s65
      %s69 = sphi 0, %s68
      %s85 = sphi 0, %s69
      %s91 = sphi 0, %s93
      %s94 = sphi 0, %s91
      %s95 = sphi 0, %s94
      %s111 = sphi 0, %s95
      %s117 = sphi 0, %s119
      %s120 = sphi 0, %s117
      %s121 = sphi 0, %s120
      %s137 = sphi 0, %s121
    $region4: #{tpu_custom_call.1} parent=1 // loop_header_branch
      %16 = sbr.rel (%p14) target = $region8
    $region5: #{tpu_custom_call.1} parent=1 // loop_body
      %s18 = ssub.s32 %s13, 1
      %s19 = ssub.s32 %s13, 2
      %s20 = sadd.s32 %s13, 1
      %s22 = sadd.s32 %s21, 1
      %p25 = scmp.eq.s32.totalorder %s13, 1
      %p26 = scmp.ne.s32.totalorder %s21, %s23
      %p27 = scmp.eq.s32.totalorder %s13, 0
      %p28 = por %p26, %p27
      %p29 = scmp.ne.s32.totalorder %s21, %s23
      %p30 = scmp.eq.s32.totalorder %s18, 1
      %p31 = por %p29, %p30
      %p32 = scmp.ne.s32.totalorder %s23, %s24
      %p33 = scmp.eq.s32.totalorder %s18, 0
      %p34 = por %p32, %p33
      %p35 = scmp.ne.s32.totalorder %s23, %s24
      %p36 = scmp.eq.s32.totalorder %s19, 1
      %p37 = por %p35, %p36
      %p39 = scmp.ne.s32.totalorder %s24, %s38
      %p40 = scmp.eq.s32.totalorder %s19, 0
      %p41 = por %p39, %p40
      %s43 = sadd.s32 %s42, 1
      %p46 = scmp.eq.s32.totalorder %s13, 1
      %p47 = scmp.ne.s32.totalorder %s42, %s44
      %p48 = scmp.eq.s32.totalorder %s13, 0
      %p49 = por %p47, %p48
      %p50 = scmp.ne.s32.totalorder %s42, %s44
      %p51 = scmp.eq.s32.totalorder %s18, 1
      %p52 = por %p50, %p51
      %p53 = scmp.ne.s32.totalorder %s44, %s45
      %p54 = scmp.eq.s32.totalorder %s18, 0
      %p55 = por %p53, %p54
      %p56 = scmp.ne.s32.totalorder %s44, %s45
      %p57 = scmp.eq.s32.totalorder %s19, 1
      %p58 = por %p56, %p57
      %p60 = scmp.ne.s32.totalorder %s45, %s59
      %p61 = scmp.eq.s32.totalorder %s19, 0
      %p62 = por %p60, %p61
      %s63 = ssub.s32 %s13, %s20
      %p64 = scmp.eq.s32.totalorder %s63, 0
      %s66 = sadd.s32 %s65, 1
      %s67 = scalar_select %p64, %s65, %s66
      %p70 = pneg %p64
      %p71 = scmp.eq.s32.totalorder %s13, 1
      %p72 = por %p70, %p71
      %p73 = scmp.ne.s32.totalorder %s65, %s68
      %p74 = scmp.eq.s32.totalorder %s13, 0
      %p75 = por %p73, %p74
      %p76 = scmp.ne.s32.totalorder %s65, %s68
      %p77 = scmp.eq.s32.totalorder %s18, 1
      %p78 = por %p76, %p77
      %p79 = scmp.ne.s32.totalorder %s68, %s69
      %p80 = scmp.eq.s32.totalorder %s18, 0
      %p81 = por %p79, %p80
      %p82 = scmp.ne.s32.totalorder %s68, %s69
      %p83 = scmp.eq.s32.totalorder %s19, 1
      %p84 = por %p82, %p83
      %p86 = scmp.ne.s32.totalorder %s69, %s85
      %p87 = scmp.eq.s32.totalorder %s19, 0
      %p88 = por %p86, %p87
      %s89 = ssub.s32 %s13, %s20
      %p90 = scmp.eq.s32.totalorder %s89, 0
      %s92 = sadd.s32 %s91, 1
      %s93 = scalar_select %p90, %s91, %s92
      %p96 = pneg %p90
      %p97 = scmp.eq.s32.totalorder %s13, 1
      %p98 = por %p96, %p97
      %p99 = scmp.ne.s32.totalorder %s91, %s94
      %p100 = scmp.eq.s32.totalorder %s13, 0
      %p101 = por %p99, %p100
      %p102 = scmp.ne.s32.totalorder %s91, %s94
      %p103 = scmp.eq.s32.totalorder %s18, 1
      %p104 = por %p102, %p103
      %p105 = scmp.ne.s32.totalorder %s94, %s95
      %p106 = scmp.eq.s32.totalorder %s18, 0
      %p107 = por %p105, %p106
      %p108 = scmp.ne.s32.totalorder %s94, %s95
      %p109 = scmp.eq.s32.totalorder %s19, 1
      %p110 = por %p108, %p109
      %p112 = scmp.ne.s32.totalorder %s95, %s111
      %p113 = scmp.eq.s32.totalorder %s19, 0
      %p114 = por %p112, %p113
      %s115 = ssub.s32 %s13, %s20
      %p116 = scmp.eq.s32.totalorder %s115, 0
      %s118 = sadd.s32 %s117, 1
      %s119 = scalar_select %p116, %s117, %s118
      %p122 = pneg %p116
      %p123 = scmp.eq.s32.totalorder %s13, 1
      %p124 = por %p122, %p123
      %p125 = scmp.ne.s32.totalorder %s117, %s120
      %p126 = scmp.eq.s32.totalorder %s13, 0
      %p127 = por %p125, %p126
      %p128 = scmp.ne.s32.totalorder %s117, %s120
      %p129 = scmp.eq.s32.totalorder %s18, 1
      %p130 = por %p128, %p129
      %p131 = scmp.ne.s32.totalorder %s120, %s121
      %p132 = scmp.eq.s32.totalorder %s18, 0
      %p133 = por %p131, %p132
      %p134 = scmp.ne.s32.totalorder %s120, %s121
      %p135 = scmp.eq.s32.totalorder %s19, 1
      %p136 = por %p134, %p135
      %p138 = scmp.ne.s32.totalorder %s121, %s137
      %p139 = scmp.eq.s32.totalorder %s19, 0
      %p140 = por %p138, %p139
      %p141 = scmp.le.s32.totalorder 1, %s13
      %p142 = scmp.lt.s32.totalorder %s13, 3
      %p143 = pnand %p141, %p142
      %p144 = pneg %p143
      // Predicated region
      $region9: #{tpu_custom_call.1} parent=5 // pred_check
        _
      $region10: #{tpu_custom_call.1} parent=5 // pred_check_branch
        %146 = sbr.rel (%p143) target = $region12
      $region11: #{tpu_custom_call.1} parent=5 // pred_region
        %s147 = ssub.s32 %s13, 1
        // Predicated region
        $region13: #{tpu_custom_call.1} parent=11 // pred_check
          %p148 = pneg %p34
        $region14: #{tpu_custom_call.1} parent=11 // pred_check_branch
          %150 = sbr.rel (%p148) target = $region16
        $region15: #{tpu_custom_call.1} parent=11 // pred_region
          _
        $region16: #{tpu_custom_call.1} parent=11 // pred_fallthru
          _
        // Predicated region
        $region17: #{tpu_custom_call.1} parent=11 // pred_check
          %p151 = pneg %p55
        $region18: #{tpu_custom_call.1} parent=11 // pred_check_branch
          %153 = sbr.rel (%p151) target = $region20
        $region19: #{tpu_custom_call.1} parent=11 // pred_region
          _
        $region20: #{tpu_custom_call.1} parent=11 // pred_fallthru
          _
      $region12: #{tpu_custom_call.1} parent=5 // pred_fallthru
        _
      %p154 = scmp.lt.s32.totalorder %s13, 2
      // Predicated region
      $region21: #{tpu_custom_call.1} parent=5 // pred_check
        %p155 = pneg %p154
      $region22: #{tpu_custom_call.1} parent=5 // pred_check_branch
        %157 = sbr.rel (%p155) target = $region24
      $region23: #{tpu_custom_call.1} parent=5 // pred_region
        // Predicated region
        $region25: #{tpu_custom_call.1} parent=23 // pred_check
          %p158 = pneg %p75
        $region26: #{tpu_custom_call.1} parent=23 // pred_check_branch
          %160 = sbr.rel (%p158) target = $region28
        $region27: #{tpu_custom_call.1} parent=23 // pred_region
          %p161 = scmp.lt.s32.totalorder %s13, 1
          %s162 = scalar_select %p161, %s13, 1
          %s163 = smul.addr %s162, 2
          %s164 = smul.addr %s163, 2
          %s165 = scalar_lea.vmem %s2, %s164
        $region28: #{tpu_custom_call.1} parent=23 // pred_fallthru
          _
        // Predicated region
        $region29: #{tpu_custom_call.1} parent=23 // pred_check
          %p166 = pneg %p101
        $region30: #{tpu_custom_call.1} parent=23 // pred_check_branch
          %168 = sbr.rel (%p166) target = $region32
        $region31: #{tpu_custom_call.1} parent=23 // pred_region
          %p169 = scmp.lt.s32.totalorder %s13, 1
          %s170 = scalar_select %p169, %s13, 1
          %s171 = smul.addr %s170, 32
          %s172 = smul.addr %s171, 8
          %s173 = scalar_lea.vmem %s3, %s172
        $region32: #{tpu_custom_call.1} parent=23 // pred_fallthru
          _
      $region24: #{tpu_custom_call.1} parent=5 // pred_fallthru
        _
      %p174 = scmp.le.s32.totalorder 1, %s13
      %p175 = scmp.lt.s32.totalorder %s13, 3
      %p176 = pnand %p174, %p175
      %p177 = pneg %p176
      // Predicated region
      $region33: #{tpu_custom_call.1} parent=5 // pred_check
        _
      $region34: #{tpu_custom_call.1} parent=5 // pred_check_branch
        %179 = sbr.rel (%p176) target = $region36
      $region35: #{tpu_custom_call.1} parent=5 // pred_region
        %s180 = ssub.s32 %s13, 1
        %p181 = pneg %p34
        %p182 = pneg %p31
        %p183 = pneg %p55
        %p184 = pneg %p52
        %p185 = scmp.lt.s32.totalorder %s18, 1
        %s186 = scalar_select %p185, %s18, 1
        %s187 = smul.addr %s186, 2
        %s188 = smul.addr %s187, 2
        %s189 = scalar_lea.vmem %s2, %s188
        %p190 = pneg %p81
        %p191 = pneg %p78
        %p192 = scmp.lt.s32.totalorder %s18, 1
        %s193 = scalar_select %p192, %s18, 1
        %s194 = smul.addr %s193, 32
        %s195 = smul.addr %s194, 8
        %s196 = scalar_lea.vmem %s3, %s195
        %p197 = pneg %p107
        %p198 = pneg %p104
        %p199 = pneg %p133
        %p200 = pneg %p130
        %s201 = sand.u32 %s120, 1
        %s202 = scalar_lea.sflag [#allocation3], %s201
        %s203 = sand.u32 %s120, 1
        %s204 = scalar_lea.vmem [#allocation2], %s203
        %p205 = scmp.lt.s32.totalorder %s18, 1
        %s206 = scalar_select %p205, %s18, 1
        %s207 = smul.addr %s206, 2
        %s208 = smul.addr %s207, 2
        %s209 = scalar_lea.vmem %s2, %s208
        %p210 = scmp.lt.s32.totalorder %s18, 1
        %s211 = scalar_select %p210, %s18, 1
        %s212 = smul.addr %s211, 32
        %s213 = smul.addr %s212, 8
        %s214 = scalar_lea.vmem %s3, %s213
        %v215 = vld [vmem:[%s0] ss:$2 sm:$0x3]
        %s216 = scalar_lea.vmem %s0, 1
        %v217 = vld [vmem:[%s216] ss:$2 sm:$0x3]
        %v218 = vld [vmem:[%s1] sm:$0xff]
        %v219 = vld [vmem:[%s1 + $0x8] sm:$0xff]
        %v220 = vld [vmem:[%s1 + $0x10] sm:$0xff]
        %v221 = vld [vmem:[%s1 + $0x18] sm:$0xff]
        %223 = vset.pattern.permute.xlu0 0
        %224 = vperm.xlu0 %223, %v218
        %v225 = vpop.permute.xlu0 %224
        %228 = vset.pattern.permute.xlu0 0
        %229 = vperm.xlu0 %228, %v219
        %v230 = vpop.permute.xlu0 %229
        %233 = vset.pattern.permute.xlu0 0
        %234 = vperm.xlu0 %233, %v220
        %v235 = vpop.permute.xlu0 %234
        %238 = vset.pattern.permute.xlu0 0
        %239 = vperm.xlu0 %238, %v221
        %v240 = vpop.permute.xlu0 %239
        %v243 = vlaneseq
        %v244 = vshrl.u32 %v243, 7
        %v245 = vsub.s32 0, %v244
        %v246 = vrot.slane %v215, %v245
        %v247 = vlaneseq
        %v248 = vshrl.u32 %v247, 7
        %v249 = vsub.s32 1, %v248
        %v250 = vrot.slane %v215, %v249
        %v253 = vsub.f32 %v225, %v246
        %v254 = vsub.f32 %v225, %v250
        %v255 = vsub.f32 %v230, %v246
        %v256 = vsub.f32 %v230, %v250
        %v257 = vsub.f32 %v235, %v246
        %v258 = vsub.f32 %v235, %v250
        %v259 = vsub.f32 %v240, %v246
        %v260 = vsub.f32 %v240, %v250
        %261 = vset.pattern.permute.xlu0 1
        %262 = vperm.xlu0 %261, %v218
        %v263 = vpop.permute.xlu0 %262
        %265 = vset.pattern.permute.xlu0 1
        %266 = vperm.xlu0 %265, %v219
        %v267 = vpop.permute.xlu0 %266
        %269 = vset.pattern.permute.xlu0 1
        %270 = vperm.xlu0 %269, %v220
        %v271 = vpop.permute.xlu0 %270
        %273 = vset.pattern.permute.xlu0 1
        %274 = vperm.xlu0 %273, %v221
        %v275 = vpop.permute.xlu0 %274
        %v278 = vlaneseq
        %v279 = vshrl.u32 %v278, 7
        %v280 = vsub.s32 0, %v279
        %v281 = vrot.slane %v217, %v280
        %v282 = vlaneseq
        %v283 = vshrl.u32 %v282, 7
        %v284 = vsub.s32 1, %v283
        %v285 = vrot.slane %v217, %v284
        %v288 = vsub.f32 %v263, %v281
        %v289 = vsub.f32 %v263, %v285
        %v290 = vsub.f32 %v267, %v281
        %v291 = vsub.f32 %v267, %v285
        %v292 = vsub.f32 %v271, %v281
        %v293 = vsub.f32 %v271, %v285
        %v294 = vsub.f32 %v275, %v281
        %v295 = vsub.f32 %v275, %v285
        %v296 = vmul.f32 %v253, %v253
        %v297 = vmul.f32 %v254, %v254
        %v298 = vmul.f32 %v255, %v255
        %v299 = vmul.f32 %v256, %v256
        %v300 = vmul.f32 %v257, %v257
        %v301 = vmul.f32 %v258, %v258
        %v302 = vmul.f32 %v259, %v259
        %v303 = vmul.f32 %v260, %v260
        %v304 = vmul.f32 %v288, %v288
        %v305 = vmul.f32 %v289, %v289
        %v306 = vmul.f32 %v290, %v290
        %v307 = vmul.f32 %v291, %v291
        %v308 = vmul.f32 %v292, %v292
        %v309 = vmul.f32 %v293, %v293
        %v310 = vmul.f32 %v294, %v294
        %v311 = vmul.f32 %v295, %v295
        %v312 = vadd.f32 %v296, %v304
        %v313 = vadd.f32 %v297, %v305
        %v314 = vadd.f32 %v298, %v306
        %v315 = vadd.f32 %v299, %v307
        %v316 = vadd.f32 %v300, %v308
        %v317 = vadd.f32 %v301, %v309
        %v318 = vadd.f32 %v302, %v310
        %v319 = vadd.f32 %v303, %v311
        %v320 = vld [vmem:[%s214] sm:$0xff]
        %v321 = vld [vmem:[%s214 + $0x8] sm:$0xff]
        %v322 = vld [vmem:[%s214 + $0x10] sm:$0xff]
        %v323 = vld [vmem:[%s214 + $0x18] sm:$0xff]
        %vm324 = vcmp.gt.f32.partialorder %v320, 0.5
        %vm325 = vcmp.gt.f32.partialorder %v321, 0.5
        %vm326 = vcmp.gt.f32.partialorder %v322, 0.5
        %vm327 = vcmp.gt.f32.partialorder %v323, 0.5
        %v328 = vsel %vm324, 1, 0
        %v329 = vsel %vm325, 1, 0
        %v330 = vsel %vm326, 1, 0
        %v331 = vsel %vm327, 1, 0
        %332 = vset.pattern.permute.xlu0 0
        %333 = vperm.xlu0 %332, %v328
        %v334 = vpop.permute.xlu0 %333
        %335 = vset.pattern.permute.xlu0 0
        %336 = vperm.xlu0 %335, %v329
        %v337 = vpop.permute.xlu0 %336
        %338 = vset.pattern.permute.xlu0 0
        %339 = vperm.xlu0 %338, %v330
        %v340 = vpop.permute.xlu0 %339
        %341 = vset.pattern.permute.xlu0 0
        %342 = vperm.xlu0 %341, %v331
        %v343 = vpop.permute.xlu0 %342
        %vm344 = vcmp.eq.s32.totalorder %v334, 1
        %vm345 = vcmp.eq.s32.totalorder %v337, 1
        %vm346 = vcmp.eq.s32.totalorder %v340, 1
        %vm347 = vcmp.eq.s32.totalorder %v343, 1
        %v348 = vsel %vm344, 1e+30, %v312
        %v349 = vsel %vm344, 1e+30, %v313
        %v350 = vsel %vm345, 1e+30, %v314
        %v351 = vsel %vm345, 1e+30, %v315
        %v352 = vsel %vm346, 1e+30, %v316
        %v353 = vsel %vm346, 1e+30, %v317
        %v354 = vsel %vm347, 1e+30, %v318
        %v355 = vsel %vm347, 1e+30, %v319
        %v356 = vmin.f32 %v348, %v352
        %v357 = vmin.f32 %v350, %v354
        %v358 = vmin.f32 %v356, %v357
        %v359 = vrot.slane %v358, 4
        %v360 = vmin.f32 %v358, %v359
        %v361 = vrot.slane %v360, 2
        %v362 = vmin.f32 %v360, %v361
        %v363 = vrot.slane %v362, 1
        %v364 = vmin.f32 %v362, %v363
        %v365 = vmin.f32 %v349, %v353
        %v366 = vmin.f32 %v351, %v355
        %v367 = vmin.f32 %v365, %v366
        %v368 = vrot.slane %v367, 4
        %v369 = vmin.f32 %v367, %v368
        %v370 = vrot.slane %v369, 2
        %v371 = vmin.f32 %v369, %v370
        %v372 = vrot.slane %v371, 1
        %v373 = vmin.f32 %v371, %v372
        %v374 = vmin.f32 %v364, 1e+30
        %v375 = vmin.f32 %v373, 1e+30
        %v376 = vsel %vm344, %v312, 1e+30
        %v377 = vsel %vm344, %v313, 1e+30
        %v378 = vsel %vm345, %v314, 1e+30
        %v379 = vsel %vm345, %v315, 1e+30
        %v380 = vsel %vm346, %v316, 1e+30
        %v381 = vsel %vm346, %v317, 1e+30
        %v382 = vsel %vm347, %v318, 1e+30
        %v383 = vsel %vm347, %v319, 1e+30
        %v384 = vmin.f32 %v376, %v380
        %v385 = vmin.f32 %v378, %v382
        %v386 = vmin.f32 %v384, %v385
        %v387 = vrot.slane %v386, 4
        %v388 = vmin.f32 %v386, %v387
        %v389 = vrot.slane %v388, 2
        %v390 = vmin.f32 %v388, %v389
        %v391 = vrot.slane %v390, 1
        %v392 = vmin.f32 %v390, %v391
        %v393 = vmin.f32 %v377, %v381
        %v394 = vmin.f32 %v379, %v383
        %v395 = vmin.f32 %v393, %v394
        %v396 = vrot.slane %v395, 4
        %v397 = vmin.f32 %v395, %v396
        %v398 = vrot.slane %v397, 2
        %v399 = vmin.f32 %v397, %v398
        %v400 = vrot.slane %v399, 1
        %v401 = vmin.f32 %v399, %v400
        %v402 = vmin.f32 %v392, 1e+30
        %v403 = vmin.f32 %v401, 1e+30
        %404 = vset.pattern.permute.xlu0 1
        %405 = vperm.xlu0 %404, %v328
        %v406 = vpop.permute.xlu0 %405
        %407 = vset.pattern.permute.xlu0 1
        %408 = vperm.xlu0 %407, %v329
        %v409 = vpop.permute.xlu0 %408
        %410 = vset.pattern.permute.xlu0 1
        %411 = vperm.xlu0 %410, %v330
        %v412 = vpop.permute.xlu0 %411
        %413 = vset.pattern.permute.xlu0 1
        %414 = vperm.xlu0 %413, %v331
        %v415 = vpop.permute.xlu0 %414
        %vm416 = vcmp.eq.s32.totalorder %v406, 1
        %vm417 = vcmp.eq.s32.totalorder %v409, 1
        %vm418 = vcmp.eq.s32.totalorder %v412, 1
        %vm419 = vcmp.eq.s32.totalorder %v415, 1
        %v420 = vsel %vm416, 1e+30, %v312
        %v421 = vsel %vm416, 1e+30, %v313
        %v422 = vsel %vm417, 1e+30, %v314
        %v423 = vsel %vm417, 1e+30, %v315
        %v424 = vsel %vm418, 1e+30, %v316
        %v425 = vsel %vm418, 1e+30, %v317
        %v426 = vsel %vm419, 1e+30, %v318
        %v427 = vsel %vm419, 1e+30, %v319
        %v428 = vmin.f32 %v420, %v424
        %v429 = vmin.f32 %v422, %v426
        %v430 = vmin.f32 %v428, %v429
        %v431 = vrot.slane %v430, 4
        %v432 = vmin.f32 %v430, %v431
        %v433 = vrot.slane %v432, 2
        %v434 = vmin.f32 %v432, %v433
        %v435 = vrot.slane %v434, 1
        %v436 = vmin.f32 %v434, %v435
        %v437 = vmin.f32 %v421, %v425
        %v438 = vmin.f32 %v423, %v427
        %v439 = vmin.f32 %v437, %v438
        %v440 = vrot.slane %v439, 4
        %v441 = vmin.f32 %v439, %v440
        %v442 = vrot.slane %v441, 2
        %v443 = vmin.f32 %v441, %v442
        %v444 = vrot.slane %v443, 1
        %v445 = vmin.f32 %v443, %v444
        %v446 = vmin.f32 %v436, 1e+30
        %v447 = vmin.f32 %v445, 1e+30
        %v448 = vsel %vm416, %v312, 1e+30
        %v449 = vsel %vm416, %v313, 1e+30
        %v450 = vsel %vm417, %v314, 1e+30
        %v451 = vsel %vm417, %v315, 1e+30
        %v452 = vsel %vm418, %v316, 1e+30
        %v453 = vsel %vm418, %v317, 1e+30
        %v454 = vsel %vm419, %v318, 1e+30
        %v455 = vsel %vm419, %v319, 1e+30
        %v456 = vmin.f32 %v448, %v452
        %v457 = vmin.f32 %v450, %v454
        %v458 = vmin.f32 %v456, %v457
        %v459 = vrot.slane %v458, 4
        %v460 = vmin.f32 %v458, %v459
        %v461 = vrot.slane %v460, 2
        %v462 = vmin.f32 %v460, %v461
        %v463 = vrot.slane %v462, 1
        %v464 = vmin.f32 %v462, %v463
        %v465 = vmin.f32 %v449, %v453
        %v466 = vmin.f32 %v451, %v455
        %v467 = vmin.f32 %v465, %v466
        %v468 = vrot.slane %v467, 4
        %v469 = vmin.f32 %v467, %v468
        %v470 = vrot.slane %v469, 2
        %v471 = vmin.f32 %v469, %v470
        %v472 = vrot.slane %v471, 1
        %v473 = vmin.f32 %v471, %v472
        %v474 = vmin.f32 %v464, 1e+30
        %v475 = vmin.f32 %v473, 1e+30
        %s476 = scalar_lea.vmem %s1, 32
        %v477 = vld [vmem:[%s476] sm:$0xff]
        %v478 = vld [vmem:[%s476 + $0x8] sm:$0xff]
        %v479 = vld [vmem:[%s476 + $0x10] sm:$0xff]
        %v480 = vld [vmem:[%s476 + $0x18] sm:$0xff]
        %482 = vset.pattern.permute.xlu0 0
        %483 = vperm.xlu0 %482, %v477
        %v484 = vpop.permute.xlu0 %483
        %487 = vset.pattern.permute.xlu0 0
        %488 = vperm.xlu0 %487, %v478
        %v489 = vpop.permute.xlu0 %488
        %492 = vset.pattern.permute.xlu0 0
        %493 = vperm.xlu0 %492, %v479
        %v494 = vpop.permute.xlu0 %493
        %497 = vset.pattern.permute.xlu0 0
        %498 = vperm.xlu0 %497, %v480
        %v499 = vpop.permute.xlu0 %498
        %v501 = vsub.f32 %v484, %v246
        %v502 = vsub.f32 %v484, %v250
        %v503 = vsub.f32 %v489, %v246
        %v504 = vsub.f32 %v489, %v250
        %v505 = vsub.f32 %v494, %v246
        %v506 = vsub.f32 %v494, %v250
        %v507 = vsub.f32 %v499, %v246
        %v508 = vsub.f32 %v499, %v250
        %509 = vset.pattern.permute.xlu0 1
        %510 = vperm.xlu0 %509, %v477
        %v511 = vpop.permute.xlu0 %510
        %513 = vset.pattern.permute.xlu0 1
        %514 = vperm.xlu0 %513, %v478
        %v515 = vpop.permute.xlu0 %514
        %517 = vset.pattern.permute.xlu0 1
        %518 = vperm.xlu0 %517, %v479
        %v519 = vpop.permute.xlu0 %518
        %521 = vset.pattern.permute.xlu0 1
        %522 = vperm.xlu0 %521, %v480
        %v523 = vpop.permute.xlu0 %522
        %v525 = vsub.f32 %v511, %v281
        %v526 = vsub.f32 %v511, %v285
        %v527 = vsub.f32 %v515, %v281
        %v528 = vsub.f32 %v515, %v285
        %v529 = vsub.f32 %v519, %v281
        %v530 = vsub.f32 %v519, %v285
        %v531 = vsub.f32 %v523, %v281
        %v532 = vsub.f32 %v523, %v285
        %v533 = vmul.f32 %v501, %v501
        %v534 = vmul.f32 %v502, %v502
        %v535 = vmul.f32 %v503, %v503
        %v536 = vmul.f32 %v504, %v504
        %v537 = vmul.f32 %v505, %v505
        %v538 = vmul.f32 %v506, %v506
        %v539 = vmul.f32 %v507, %v507
        %v540 = vmul.f32 %v508, %v508
        %v541 = vmul.f32 %v525, %v525
        %v542 = vmul.f32 %v526, %v526
        %v543 = vmul.f32 %v527, %v527
        %v544 = vmul.f32 %v528, %v528
        %v545 = vmul.f32 %v529, %v529
        %v546 = vmul.f32 %v530, %v530
        %v547 = vmul.f32 %v531, %v531
        %v548 = vmul.f32 %v532, %v532
        %v549 = vadd.f32 %v533, %v541
        %v550 = vadd.f32 %v534, %v542
        %v551 = vadd.f32 %v535, %v543
        %v552 = vadd.f32 %v536, %v544
        %v553 = vadd.f32 %v537, %v545
        %v554 = vadd.f32 %v538, %v546
        %v555 = vadd.f32 %v539, %v547
        %v556 = vadd.f32 %v540, %v548
        %s557 = scalar_lea.vmem %s214, 32
        %v558 = vld [vmem:[%s557] sm:$0xff]
        %v559 = vld [vmem:[%s557 + $0x8] sm:$0xff]
        %v560 = vld [vmem:[%s557 + $0x10] sm:$0xff]
        %v561 = vld [vmem:[%s557 + $0x18] sm:$0xff]
        %vm562 = vcmp.gt.f32.partialorder %v558, 0.5
        %vm563 = vcmp.gt.f32.partialorder %v559, 0.5
        %vm564 = vcmp.gt.f32.partialorder %v560, 0.5
        %vm565 = vcmp.gt.f32.partialorder %v561, 0.5
        %v566 = vsel %vm562, 1, 0
        %v567 = vsel %vm563, 1, 0
        %v568 = vsel %vm564, 1, 0
        %v569 = vsel %vm565, 1, 0
        %570 = vset.pattern.permute.xlu0 0
        %571 = vperm.xlu0 %570, %v566
        %v572 = vpop.permute.xlu0 %571
        %573 = vset.pattern.permute.xlu0 0
        %574 = vperm.xlu0 %573, %v567
        %v575 = vpop.permute.xlu0 %574
        %576 = vset.pattern.permute.xlu0 0
        %577 = vperm.xlu0 %576, %v568
        %v578 = vpop.permute.xlu0 %577
        %579 = vset.pattern.permute.xlu0 0
        %580 = vperm.xlu0 %579, %v569
        %v581 = vpop.permute.xlu0 %580
        %vm582 = vcmp.eq.s32.totalorder %v572, 1
        %vm583 = vcmp.eq.s32.totalorder %v575, 1
        %vm584 = vcmp.eq.s32.totalorder %v578, 1
        %vm585 = vcmp.eq.s32.totalorder %v581, 1
        %v586 = vsel %vm582, 1e+30, %v549
        %v587 = vsel %vm582, 1e+30, %v550
        %v588 = vsel %vm583, 1e+30, %v551
        %v589 = vsel %vm583, 1e+30, %v552
        %v590 = vsel %vm584, 1e+30, %v553
        %v591 = vsel %vm584, 1e+30, %v554
        %v592 = vsel %vm585, 1e+30, %v555
        %v593 = vsel %vm585, 1e+30, %v556
        %v594 = vmin.f32 %v586, %v590
        %v595 = vmin.f32 %v588, %v592
        %v596 = vmin.f32 %v594, %v595
        %v597 = vrot.slane %v596, 4
        %v598 = vmin.f32 %v596, %v597
        %v599 = vrot.slane %v598, 2
        %v600 = vmin.f32 %v598, %v599
        %v601 = vrot.slane %v600, 1
        %v602 = vmin.f32 %v600, %v601
        %v603 = vmin.f32 %v587, %v591
        %v604 = vmin.f32 %v589, %v593
        %v605 = vmin.f32 %v603, %v604
        %v606 = vrot.slane %v605, 4
        %v607 = vmin.f32 %v605, %v606
        %v608 = vrot.slane %v607, 2
        %v609 = vmin.f32 %v607, %v608
        %v610 = vrot.slane %v609, 1
        %v611 = vmin.f32 %v609, %v610
        %v612 = vmin.f32 %v374, %v602
        %v613 = vmin.f32 %v375, %v611
        %v614 = vsel %vm582, %v549, 1e+30
        %v615 = vsel %vm582, %v550, 1e+30
        %v616 = vsel %vm583, %v551, 1e+30
        %v617 = vsel %vm583, %v552, 1e+30
        %v618 = vsel %vm584, %v553, 1e+30
        %v619 = vsel %vm584, %v554, 1e+30
        %v620 = vsel %vm585, %v555, 1e+30
        %v621 = vsel %vm585, %v556, 1e+30
        %v622 = vmin.f32 %v614, %v618
        %v623 = vmin.f32 %v616, %v620
        %v624 = vmin.f32 %v622, %v623
        %v625 = vrot.slane %v624, 4
        %v626 = vmin.f32 %v624, %v625
        %v627 = vrot.slane %v626, 2
        %v628 = vmin.f32 %v626, %v627
        %v629 = vrot.slane %v628, 1
        %v630 = vmin.f32 %v628, %v629
        %v631 = vmin.f32 %v615, %v619
        %v632 = vmin.f32 %v617, %v621
        %v633 = vmin.f32 %v631, %v632
        %v634 = vrot.slane %v633, 4
        %v635 = vmin.f32 %v633, %v634
        %v636 = vrot.slane %v635, 2
        %v637 = vmin.f32 %v635, %v636
        %v638 = vrot.slane %v637, 1
        %v639 = vmin.f32 %v637, %v638
        %v640 = vmin.f32 %v402, %v630
        %v641 = vmin.f32 %v403, %v639
        %642 = vset.pattern.permute.xlu0 1
        %643 = vperm.xlu0 %642, %v566
        %v644 = vpop.permute.xlu0 %643
        %645 = vset.pattern.permute.xlu0 1
        %646 = vperm.xlu0 %645, %v567
        %v647 = vpop.permute.xlu0 %646
        %648 = vset.pattern.permute.xlu0 1
        %649 = vperm.xlu0 %648, %v568
        %v650 = vpop.permute.xlu0 %649
        %651 = vset.pattern.permute.xlu0 1
        %652 = vperm.xlu0 %651, %v569
        %v653 = vpop.permute.xlu0 %652
        %vm654 = vcmp.eq.s32.totalorder %v644, 1
        %vm655 = vcmp.eq.s32.totalorder %v647, 1
        %vm656 = vcmp.eq.s32.totalorder %v650, 1
        %vm657 = vcmp.eq.s32.totalorder %v653, 1
        %v658 = vsel %vm654, 1e+30, %v549
        %v659 = vsel %vm654, 1e+30, %v550
        %v660 = vsel %vm655, 1e+30, %v551
        %v661 = vsel %vm655, 1e+30, %v552
        %v662 = vsel %vm656, 1e+30, %v553
        %v663 = vsel %vm656, 1e+30, %v554
        %v664 = vsel %vm657, 1e+30, %v555
        %v665 = vsel %vm657, 1e+30, %v556
        %v666 = vmin.f32 %v658, %v662
        %v667 = vmin.f32 %v660, %v664
        %v668 = vmin.f32 %v666, %v667
        %v669 = vrot.slane %v668, 4
        %v670 = vmin.f32 %v668, %v669
        %v671 = vrot.slane %v670, 2
        %v672 = vmin.f32 %v670, %v671
        %v673 = vrot.slane %v672, 1
        %v674 = vmin.f32 %v672, %v673
        %v675 = vmin.f32 %v659, %v663
        %v676 = vmin.f32 %v661, %v665
        %v677 = vmin.f32 %v675, %v676
        %v678 = vrot.slane %v677, 4
        %v679 = vmin.f32 %v677, %v678
        %v680 = vrot.slane %v679, 2
        %v681 = vmin.f32 %v679, %v680
        %v682 = vrot.slane %v681, 1
        %v683 = vmin.f32 %v681, %v682
        %v684 = vmin.f32 %v446, %v674
        %v685 = vmin.f32 %v447, %v683
        %v686 = vsel %vm654, %v549, 1e+30
        %v687 = vsel %vm654, %v550, 1e+30
        %v688 = vsel %vm655, %v551, 1e+30
        %v689 = vsel %vm655, %v552, 1e+30
        %v690 = vsel %vm656, %v553, 1e+30
        %v691 = vsel %vm656, %v554, 1e+30
        %v692 = vsel %vm657, %v555, 1e+30
        %v693 = vsel %vm657, %v556, 1e+30
        %v694 = vmin.f32 %v686, %v690
        %v695 = vmin.f32 %v688, %v692
        %v696 = vmin.f32 %v694, %v695
        %v697 = vrot.slane %v696, 4
        %v698 = vmin.f32 %v696, %v697
        %v699 = vrot.slane %v698, 2
        %v700 = vmin.f32 %v698, %v699
        %v701 = vrot.slane %v700, 1
        %v702 = vmin.f32 %v700, %v701
        %v703 = vmin.f32 %v687, %v691
        %v704 = vmin.f32 %v689, %v693
        %v705 = vmin.f32 %v703, %v704
        %v706 = vrot.slane %v705, 4
        %v707 = vmin.f32 %v705, %v706
        %v708 = vrot.slane %v707, 2
        %v709 = vmin.f32 %v707, %v708
        %v710 = vrot.slane %v709, 1
        %v711 = vmin.f32 %v709, %v710
        %v712 = vmin.f32 %v474, %v702
        %v713 = vmin.f32 %v475, %v711
        %s714 = scalar_lea.vmem %s1, 64
        %v715 = vld [vmem:[%s714] sm:$0xff]
        %v716 = vld [vmem:[%s714 + $0x8] sm:$0xff]
        %v717 = vld [vmem:[%s714 + $0x10] sm:$0xff]
        %v718 = vld [vmem:[%s714 + $0x18] sm:$0xff]
        %720 = vset.pattern.permute.xlu0 0
        %721 = vperm.xlu0 %720, %v715
        %v722 = vpop.permute.xlu0 %721
        %725 = vset.pattern.permute.xlu0 0
        %726 = vperm.xlu0 %725, %v716
        %v727 = vpop.permute.xlu0 %726
        %730 = vset.pattern.permute.xlu0 0
        %731 = vperm.xlu0 %730, %v717
        %v732 = vpop.permute.xlu0 %731
        %735 = vset.pattern.permute.xlu0 0
        %736 = vperm.xlu0 %735, %v718
        %v737 = vpop.permute.xlu0 %736
        %v739 = vsub.f32 %v722, %v246
        %v740 = vsub.f32 %v722, %v250
        %v741 = vsub.f32 %v727, %v246
        %v742 = vsub.f32 %v727, %v250
        %v743 = vsub.f32 %v732, %v246
        %v744 = vsub.f32 %v732, %v250
        %v745 = vsub.f32 %v737, %v246
        %v746 = vsub.f32 %v737, %v250
        %747 = vset.pattern.permute.xlu0 1
        %748 = vperm.xlu0 %747, %v715
        %v749 = vpop.permute.xlu0 %748
        %751 = vset.pattern.permute.xlu0 1
        %752 = vperm.xlu0 %751, %v716
        %v753 = vpop.permute.xlu0 %752
        %755 = vset.pattern.permute.xlu0 1
        %756 = vperm.xlu0 %755, %v717
        %v757 = vpop.permute.xlu0 %756
        %759 = vset.pattern.permute.xlu0 1
        %760 = vperm.xlu0 %759, %v718
        %v761 = vpop.permute.xlu0 %760
        %v763 = vsub.f32 %v749, %v281
        %v764 = vsub.f32 %v749, %v285
        %v765 = vsub.f32 %v753, %v281
        %v766 = vsub.f32 %v753, %v285
        %v767 = vsub.f32 %v757, %v281
        %v768 = vsub.f32 %v757, %v285
        %v769 = vsub.f32 %v761, %v281
        %v770 = vsub.f32 %v761, %v285
        %v771 = vmul.f32 %v739, %v739
        %v772 = vmul.f32 %v740, %v740
        %v773 = vmul.f32 %v741, %v741
        %v774 = vmul.f32 %v742, %v742
        %v775 = vmul.f32 %v743, %v743
        %v776 = vmul.f32 %v744, %v744
        %v777 = vmul.f32 %v745, %v745
        %v778 = vmul.f32 %v746, %v746
        %v779 = vmul.f32 %v763, %v763
        %v780 = vmul.f32 %v764, %v764
        %v781 = vmul.f32 %v765, %v765
        %v782 = vmul.f32 %v766, %v766
        %v783 = vmul.f32 %v767, %v767
        %v784 = vmul.f32 %v768, %v768
        %v785 = vmul.f32 %v769, %v769
        %v786 = vmul.f32 %v770, %v770
        %v787 = vadd.f32 %v771, %v779
        %v788 = vadd.f32 %v772, %v780
        %v789 = vadd.f32 %v773, %v781
        %v790 = vadd.f32 %v774, %v782
        %v791 = vadd.f32 %v775, %v783
        %v792 = vadd.f32 %v776, %v784
        %v793 = vadd.f32 %v777, %v785
        %v794 = vadd.f32 %v778, %v786
        %s795 = scalar_lea.vmem %s214, 64
        %v796 = vld [vmem:[%s795] sm:$0xff]
        %v797 = vld [vmem:[%s795 + $0x8] sm:$0xff]
        %v798 = vld [vmem:[%s795 + $0x10] sm:$0xff]
        %v799 = vld [vmem:[%s795 + $0x18] sm:$0xff]
        %vm800 = vcmp.gt.f32.partialorder %v796, 0.5
        %vm801 = vcmp.gt.f32.partialorder %v797, 0.5
        %vm802 = vcmp.gt.f32.partialorder %v798, 0.5
        %vm803 = vcmp.gt.f32.partialorder %v799, 0.5
        %v804 = vsel %vm800, 1, 0
        %v805 = vsel %vm801, 1, 0
        %v806 = vsel %vm802, 1, 0
        %v807 = vsel %vm803, 1, 0
        %808 = vset.pattern.permute.xlu0 0
        %809 = vperm.xlu0 %808, %v804
        %v810 = vpop.permute.xlu0 %809
        %811 = vset.pattern.permute.xlu0 0
        %812 = vperm.xlu0 %811, %v805
        %v813 = vpop.permute.xlu0 %812
        %814 = vset.pattern.permute.xlu0 0
        %815 = vperm.xlu0 %814, %v806
        %v816 = vpop.permute.xlu0 %815
        %817 = vset.pattern.permute.xlu0 0
        %818 = vperm.xlu0 %817, %v807
        %v819 = vpop.permute.xlu0 %818
        %vm820 = vcmp.eq.s32.totalorder %v810, 1
        %vm821 = vcmp.eq.s32.totalorder %v813, 1
        %vm822 = vcmp.eq.s32.totalorder %v816, 1
        %vm823 = vcmp.eq.s32.totalorder %v819, 1
        %v824 = vsel %vm820, 1e+30, %v787
        %v825 = vsel %vm820, 1e+30, %v788
        %v826 = vsel %vm821, 1e+30, %v789
        %v827 = vsel %vm821, 1e+30, %v790
        %v828 = vsel %vm822, 1e+30, %v791
        %v829 = vsel %vm822, 1e+30, %v792
        %v830 = vsel %vm823, 1e+30, %v793
        %v831 = vsel %vm823, 1e+30, %v794
        %v832 = vmin.f32 %v824, %v828
        %v833 = vmin.f32 %v826, %v830
        %v834 = vmin.f32 %v832, %v833
        %v835 = vrot.slane %v834, 4
        %v836 = vmin.f32 %v834, %v835
        %v837 = vrot.slane %v836, 2
        %v838 = vmin.f32 %v836, %v837
        %v839 = vrot.slane %v838, 1
        %v840 = vmin.f32 %v838, %v839
        %v841 = vmin.f32 %v825, %v829
        %v842 = vmin.f32 %v827, %v831
        %v843 = vmin.f32 %v841, %v842
        %v844 = vrot.slane %v843, 4
        %v845 = vmin.f32 %v843, %v844
        %v846 = vrot.slane %v845, 2
        %v847 = vmin.f32 %v845, %v846
        %v848 = vrot.slane %v847, 1
        %v849 = vmin.f32 %v847, %v848
        %v850 = vmin.f32 %v612, %v840
        %v851 = vmin.f32 %v613, %v849
        %v852 = vsel %vm820, %v787, 1e+30
        %v853 = vsel %vm820, %v788, 1e+30
        %v854 = vsel %vm821, %v789, 1e+30
        %v855 = vsel %vm821, %v790, 1e+30
        %v856 = vsel %vm822, %v791, 1e+30
        %v857 = vsel %vm822, %v792, 1e+30
        %v858 = vsel %vm823, %v793, 1e+30
        %v859 = vsel %vm823, %v794, 1e+30
        %v860 = vmin.f32 %v852, %v856
        %v861 = vmin.f32 %v854, %v858
        %v862 = vmin.f32 %v860, %v861
        %v863 = vrot.slane %v862, 4
        %v864 = vmin.f32 %v862, %v863
        %v865 = vrot.slane %v864, 2
        %v866 = vmin.f32 %v864, %v865
        %v867 = vrot.slane %v866, 1
        %v868 = vmin.f32 %v866, %v867
        %v869 = vmin.f32 %v853, %v857
        %v870 = vmin.f32 %v855, %v859
        %v871 = vmin.f32 %v869, %v870
        %v872 = vrot.slane %v871, 4
        %v873 = vmin.f32 %v871, %v872
        %v874 = vrot.slane %v873, 2
        %v875 = vmin.f32 %v873, %v874
        %v876 = vrot.slane %v875, 1
        %v877 = vmin.f32 %v875, %v876
        %v878 = vmin.f32 %v640, %v868
        %v879 = vmin.f32 %v641, %v877
        %880 = vset.pattern.permute.xlu0 1
        %881 = vperm.xlu0 %880, %v804
        %v882 = vpop.permute.xlu0 %881
        %883 = vset.pattern.permute.xlu0 1
        %884 = vperm.xlu0 %883, %v805
        %v885 = vpop.permute.xlu0 %884
        %886 = vset.pattern.permute.xlu0 1
        %887 = vperm.xlu0 %886, %v806
        %v888 = vpop.permute.xlu0 %887
        %889 = vset.pattern.permute.xlu0 1
        %890 = vperm.xlu0 %889, %v807
        %v891 = vpop.permute.xlu0 %890
        %vm892 = vcmp.eq.s32.totalorder %v882, 1
        %vm893 = vcmp.eq.s32.totalorder %v885, 1
        %vm894 = vcmp.eq.s32.totalorder %v888, 1
        %vm895 = vcmp.eq.s32.totalorder %v891, 1
        %v896 = vsel %vm892, 1e+30, %v787
        %v897 = vsel %vm892, 1e+30, %v788
        %v898 = vsel %vm893, 1e+30, %v789
        %v899 = vsel %vm893, 1e+30, %v790
        %v900 = vsel %vm894, 1e+30, %v791
        %v901 = vsel %vm894, 1e+30, %v792
        %v902 = vsel %vm895, 1e+30, %v793
        %v903 = vsel %vm895, 1e+30, %v794
        %v904 = vmin.f32 %v896, %v900
        %v905 = vmin.f32 %v898, %v902
        %v906 = vmin.f32 %v904, %v905
        %v907 = vrot.slane %v906, 4
        %v908 = vmin.f32 %v906, %v907
        %v909 = vrot.slane %v908, 2
        %v910 = vmin.f32 %v908, %v909
        %v911 = vrot.slane %v910, 1
        %v912 = vmin.f32 %v910, %v911
        %v913 = vmin.f32 %v897, %v901
        %v914 = vmin.f32 %v899, %v903
        %v915 = vmin.f32 %v913, %v914
        %v916 = vrot.slane %v915, 4
        %v917 = vmin.f32 %v915, %v916
        %v918 = vrot.slane %v917, 2
        %v919 = vmin.f32 %v917, %v918
        %v920 = vrot.slane %v919, 1
        %v921 = vmin.f32 %v919, %v920
        %v922 = vmin.f32 %v684, %v912
        %v923 = vmin.f32 %v685, %v921
        %v924 = vsel %vm892, %v787, 1e+30
        %v925 = vsel %vm892, %v788, 1e+30
        %v926 = vsel %vm893, %v789, 1e+30
        %v927 = vsel %vm893, %v790, 1e+30
        %v928 = vsel %vm894, %v791, 1e+30
        %v929 = vsel %vm894, %v792, 1e+30
        %v930 = vsel %vm895, %v793, 1e+30
        %v931 = vsel %vm895, %v794, 1e+30
        %v932 = vmin.f32 %v924, %v928
        %v933 = vmin.f32 %v926, %v930
        %v934 = vmin.f32 %v932, %v933
        %v935 = vrot.slane %v934, 4
        %v936 = vmin.f32 %v934, %v935
        %v937 = vrot.slane %v936, 2
        %v938 = vmin.f32 %v936, %v937
        %v939 = vrot.slane %v938, 1
        %v940 = vmin.f32 %v938, %v939
        %v941 = vmin.f32 %v925, %v929
        %v942 = vmin.f32 %v927, %v931
        %v943 = vmin.f32 %v941, %v942
        %v944 = vrot.slane %v943, 4
        %v945 = vmin.f32 %v943, %v944
        %v946 = vrot.slane %v945, 2
        %v947 = vmin.f32 %v945, %v946
        %v948 = vrot.slane %v947, 1
        %v949 = vmin.f32 %v947, %v948
        %v950 = vmin.f32 %v712, %v940
        %v951 = vmin.f32 %v713, %v949
        %s952 = scalar_lea.vmem %s1, 96
        %v953 = vld [vmem:[%s952] sm:$0xff]
        %v954 = vld [vmem:[%s952 + $0x8] sm:$0xff]
        %v955 = vld [vmem:[%s952 + $0x10] sm:$0xff]
        %v956 = vld [vmem:[%s952 + $0x18] sm:$0xff]
        %958 = vset.pattern.permute.xlu0 0
        %959 = vperm.xlu0 %958, %v953
        %v960 = vpop.permute.xlu0 %959
        %963 = vset.pattern.permute.xlu0 0
        %964 = vperm.xlu0 %963, %v954
        %v965 = vpop.permute.xlu0 %964
        %968 = vset.pattern.permute.xlu0 0
        %969 = vperm.xlu0 %968, %v955
        %v970 = vpop.permute.xlu0 %969
        %973 = vset.pattern.permute.xlu0 0
        %974 = vperm.xlu0 %973, %v956
        %v975 = vpop.permute.xlu0 %974
        %v977 = vsub.f32 %v960, %v246
        %v978 = vsub.f32 %v960, %v250
        %v979 = vsub.f32 %v965, %v246
        %v980 = vsub.f32 %v965, %v250
        %v981 = vsub.f32 %v970, %v246
        %v982 = vsub.f32 %v970, %v250
        %v983 = vsub.f32 %v975, %v246
        %v984 = vsub.f32 %v975, %v250
        %985 = vset.pattern.permute.xlu0 1
        %986 = vperm.xlu0 %985, %v953
        %v987 = vpop.permute.xlu0 %986
        %989 = vset.pattern.permute.xlu0 1
        %990 = vperm.xlu0 %989, %v954
        %v991 = vpop.permute.xlu0 %990
        %993 = vset.pattern.permute.xlu0 1
        %994 = vperm.xlu0 %993, %v955
        %v995 = vpop.permute.xlu0 %994
        %997 = vset.pattern.permute.xlu0 1
        %998 = vperm.xlu0 %997, %v956
        %v999 = vpop.permute.xlu0 %998
        %v1001 = vsub.f32 %v987, %v281
        %v1002 = vsub.f32 %v987, %v285
        %v1003 = vsub.f32 %v991, %v281
        %v1004 = vsub.f32 %v991, %v285
        %v1005 = vsub.f32 %v995, %v281
        %v1006 = vsub.f32 %v995, %v285
        %v1007 = vsub.f32 %v999, %v281
        %v1008 = vsub.f32 %v999, %v285
        %v1009 = vmul.f32 %v977, %v977
        %v1010 = vmul.f32 %v978, %v978
        %v1011 = vmul.f32 %v979, %v979
        %v1012 = vmul.f32 %v980, %v980
        %v1013 = vmul.f32 %v981, %v981
        %v1014 = vmul.f32 %v982, %v982
        %v1015 = vmul.f32 %v983, %v983
        %v1016 = vmul.f32 %v984, %v984
        %v1017 = vmul.f32 %v1001, %v1001
        %v1018 = vmul.f32 %v1002, %v1002
        %v1019 = vmul.f32 %v1003, %v1003
        %v1020 = vmul.f32 %v1004, %v1004
        %v1021 = vmul.f32 %v1005, %v1005
        %v1022 = vmul.f32 %v1006, %v1006
        %v1023 = vmul.f32 %v1007, %v1007
        %v1024 = vmul.f32 %v1008, %v1008
        %v1025 = vadd.f32 %v1009, %v1017
        %v1026 = vadd.f32 %v1010, %v1018
        %v1027 = vadd.f32 %v1011, %v1019
        %v1028 = vadd.f32 %v1012, %v1020
        %v1029 = vadd.f32 %v1013, %v1021
        %v1030 = vadd.f32 %v1014, %v1022
        %v1031 = vadd.f32 %v1015, %v1023
        %v1032 = vadd.f32 %v1016, %v1024
        %s1033 = scalar_lea.vmem %s214, 96
        %v1034 = vld [vmem:[%s1033] sm:$0xff]
        %v1035 = vld [vmem:[%s1033 + $0x8] sm:$0xff]
        %v1036 = vld [vmem:[%s1033 + $0x10] sm:$0xff]
        %v1037 = vld [vmem:[%s1033 + $0x18] sm:$0xff]
        %vm1038 = vcmp.gt.f32.partialorder %v1034, 0.5
        %vm1039 = vcmp.gt.f32.partialorder %v1035, 0.5
        %vm1040 = vcmp.gt.f32.partialorder %v1036, 0.5
        %vm1041 = vcmp.gt.f32.partialorder %v1037, 0.5
        %v1042 = vsel %vm1038, 1, 0
        %v1043 = vsel %vm1039, 1, 0
        %v1044 = vsel %vm1040, 1, 0
        %v1045 = vsel %vm1041, 1, 0
        %1046 = vset.pattern.permute.xlu0 0
        %1047 = vperm.xlu0 %1046, %v1042
        %v1048 = vpop.permute.xlu0 %1047
        %1049 = vset.pattern.permute.xlu0 0
        %1050 = vperm.xlu0 %1049, %v1043
        %v1051 = vpop.permute.xlu0 %1050
        %1052 = vset.pattern.permute.xlu0 0
        %1053 = vperm.xlu0 %1052, %v1044
        %v1054 = vpop.permute.xlu0 %1053
        %1055 = vset.pattern.permute.xlu0 0
        %1056 = vperm.xlu0 %1055, %v1045
        %v1057 = vpop.permute.xlu0 %1056
        %vm1058 = vcmp.eq.s32.totalorder %v1048, 1
        %vm1059 = vcmp.eq.s32.totalorder %v1051, 1
        %vm1060 = vcmp.eq.s32.totalorder %v1054, 1
        %vm1061 = vcmp.eq.s32.totalorder %v1057, 1
        %v1062 = vsel %vm1058, 1e+30, %v1025
        %v1063 = vsel %vm1058, 1e+30, %v1026
        %v1064 = vsel %vm1059, 1e+30, %v1027
        %v1065 = vsel %vm1059, 1e+30, %v1028
        %v1066 = vsel %vm1060, 1e+30, %v1029
        %v1067 = vsel %vm1060, 1e+30, %v1030
        %v1068 = vsel %vm1061, 1e+30, %v1031
        %v1069 = vsel %vm1061, 1e+30, %v1032
        %v1070 = vmin.f32 %v1062, %v1066
        %v1071 = vmin.f32 %v1064, %v1068
        %v1072 = vmin.f32 %v1070, %v1071
        %v1073 = vrot.slane %v1072, 4
        %v1074 = vmin.f32 %v1072, %v1073
        %v1075 = vrot.slane %v1074, 2
        %v1076 = vmin.f32 %v1074, %v1075
        %v1077 = vrot.slane %v1076, 1
        %v1078 = vmin.f32 %v1076, %v1077
        %v1079 = vmin.f32 %v1063, %v1067
        %v1080 = vmin.f32 %v1065, %v1069
        %v1081 = vmin.f32 %v1079, %v1080
        %v1082 = vrot.slane %v1081, 4
        %v1083 = vmin.f32 %v1081, %v1082
        %v1084 = vrot.slane %v1083, 2
        %v1085 = vmin.f32 %v1083, %v1084
        %v1086 = vrot.slane %v1085, 1
        %v1087 = vmin.f32 %v1085, %v1086
        %v1088 = vmin.f32 %v850, %v1078
        %v1089 = vmin.f32 %v851, %v1087
        %v1090 = vsel %vm1058, %v1025, 1e+30
        %v1091 = vsel %vm1058, %v1026, 1e+30
        %v1092 = vsel %vm1059, %v1027, 1e+30
        %v1093 = vsel %vm1059, %v1028, 1e+30
        %v1094 = vsel %vm1060, %v1029, 1e+30
        %v1095 = vsel %vm1060, %v1030, 1e+30
        %v1096 = vsel %vm1061, %v1031, 1e+30
        %v1097 = vsel %vm1061, %v1032, 1e+30
        %v1098 = vmin.f32 %v1090, %v1094
        %v1099 = vmin.f32 %v1092, %v1096
        %v1100 = vmin.f32 %v1098, %v1099
        %v1101 = vrot.slane %v1100, 4
        %v1102 = vmin.f32 %v1100, %v1101
        %v1103 = vrot.slane %v1102, 2
        %v1104 = vmin.f32 %v1102, %v1103
        %v1105 = vrot.slane %v1104, 1
        %v1106 = vmin.f32 %v1104, %v1105
        %v1107 = vmin.f32 %v1091, %v1095
        %v1108 = vmin.f32 %v1093, %v1097
        %v1109 = vmin.f32 %v1107, %v1108
        %v1110 = vrot.slane %v1109, 4
        %v1111 = vmin.f32 %v1109, %v1110
        %v1112 = vrot.slane %v1111, 2
        %v1113 = vmin.f32 %v1111, %v1112
        %v1114 = vrot.slane %v1113, 1
        %v1115 = vmin.f32 %v1113, %v1114
        %v1116 = vmin.f32 %v878, %v1106
        %v1117 = vmin.f32 %v879, %v1115
        %1118 = vset.pattern.permute.xlu0 1
        %1119 = vperm.xlu0 %1118, %v1042
        %v1120 = vpop.permute.xlu0 %1119
        %1121 = vset.pattern.permute.xlu0 1
        %1122 = vperm.xlu0 %1121, %v1043
        %v1123 = vpop.permute.xlu0 %1122
        %1124 = vset.pattern.permute.xlu0 1
        %1125 = vperm.xlu0 %1124, %v1044
        %v1126 = vpop.permute.xlu0 %1125
        %1127 = vset.pattern.permute.xlu0 1
        %1128 = vperm.xlu0 %1127, %v1045
        %v1129 = vpop.permute.xlu0 %1128
        %vm1130 = vcmp.eq.s32.totalorder %v1120, 1
        %vm1131 = vcmp.eq.s32.totalorder %v1123, 1
        %vm1132 = vcmp.eq.s32.totalorder %v1126, 1
        %vm1133 = vcmp.eq.s32.totalorder %v1129, 1
        %v1134 = vsel %vm1130, 1e+30, %v1025
        %v1135 = vsel %vm1130, 1e+30, %v1026
        %v1136 = vsel %vm1131, 1e+30, %v1027
        %v1137 = vsel %vm1131, 1e+30, %v1028
        %v1138 = vsel %vm1132, 1e+30, %v1029
        %v1139 = vsel %vm1132, 1e+30, %v1030
        %v1140 = vsel %vm1133, 1e+30, %v1031
        %v1141 = vsel %vm1133, 1e+30, %v1032
        %v1142 = vmin.f32 %v1134, %v1138
        %v1143 = vmin.f32 %v1136, %v1140
        %v1144 = vmin.f32 %v1142, %v1143
        %v1145 = vrot.slane %v1144, 4
        %v1146 = vmin.f32 %v1144, %v1145
        %v1147 = vrot.slane %v1146, 2
        %v1148 = vmin.f32 %v1146, %v1147
        %v1149 = vrot.slane %v1148, 1
        %v1150 = vmin.f32 %v1148, %v1149
        %v1151 = vmin.f32 %v1135, %v1139
        %v1152 = vmin.f32 %v1137, %v1141
        %v1153 = vmin.f32 %v1151, %v1152
        %v1154 = vrot.slane %v1153, 4
        %v1155 = vmin.f32 %v1153, %v1154
        %v1156 = vrot.slane %v1155, 2
        %v1157 = vmin.f32 %v1155, %v1156
        %v1158 = vrot.slane %v1157, 1
        %v1159 = vmin.f32 %v1157, %v1158
        %v1160 = vmin.f32 %v922, %v1150
        %v1161 = vmin.f32 %v923, %v1159
        %v1162 = vsel %vm1130, %v1025, 1e+30
        %v1163 = vsel %vm1130, %v1026, 1e+30
        %v1164 = vsel %vm1131, %v1027, 1e+30
        %v1165 = vsel %vm1131, %v1028, 1e+30
        %v1166 = vsel %vm1132, %v1029, 1e+30
        %v1167 = vsel %vm1132, %v1030, 1e+30
        %v1168 = vsel %vm1133, %v1031, 1e+30
        %v1169 = vsel %vm1133, %v1032, 1e+30
        %v1170 = vmin.f32 %v1162, %v1166
        %v1171 = vmin.f32 %v1164, %v1168
        %v1172 = vmin.f32 %v1170, %v1171
        %v1173 = vrot.slane %v1172, 4
        %v1174 = vmin.f32 %v1172, %v1173
        %v1175 = vrot.slane %v1174, 2
        %v1176 = vmin.f32 %v1174, %v1175
        %v1177 = vrot.slane %v1176, 1
        %v1178 = vmin.f32 %v1176, %v1177
        %v1179 = vmin.f32 %v1163, %v1167
        %v1180 = vmin.f32 %v1165, %v1169
        %v1181 = vmin.f32 %v1179, %v1180
        %v1182 = vrot.slane %v1181, 4
        %v1183 = vmin.f32 %v1181, %v1182
        %v1184 = vrot.slane %v1183, 2
        %v1185 = vmin.f32 %v1183, %v1184
        %v1186 = vrot.slane %v1185, 1
        %v1187 = vmin.f32 %v1185, %v1186
        %v1188 = vmin.f32 %v950, %v1178
        %v1189 = vmin.f32 %v951, %v1187
        %s1190 = scalar_lea.vmem %s1, 128
        %v1191 = vld [vmem:[%s1190] sm:$0xff]
        %v1192 = vld [vmem:[%s1190 + $0x8] sm:$0xff]
        %v1193 = vld [vmem:[%s1190 + $0x10] sm:$0xff]
        %v1194 = vld [vmem:[%s1190 + $0x18] sm:$0xff]
        %1196 = vset.pattern.permute.xlu0 0
        %1197 = vperm.xlu0 %1196, %v1191
        %v1198 = vpop.permute.xlu0 %1197
        %1201 = vset.pattern.permute.xlu0 0
        %1202 = vperm.xlu0 %1201, %v1192
        %v1203 = vpop.permute.xlu0 %1202
        %1206 = vset.pattern.permute.xlu0 0
        %1207 = vperm.xlu0 %1206, %v1193
        %v1208 = vpop.permute.xlu0 %1207
        %1211 = vset.pattern.permute.xlu0 0
        %1212 = vperm.xlu0 %1211, %v1194
        %v1213 = vpop.permute.xlu0 %1212
        %v1215 = vsub.f32 %v1198, %v246
        %v1216 = vsub.f32 %v1198, %v250
        %v1217 = vsub.f32 %v1203, %v246
        %v1218 = vsub.f32 %v1203, %v250
        %v1219 = vsub.f32 %v1208, %v246
        %v1220 = vsub.f32 %v1208, %v250
        %v1221 = vsub.f32 %v1213, %v246
        %v1222 = vsub.f32 %v1213, %v250
        %1223 = vset.pattern.permute.xlu0 1
        %1224 = vperm.xlu0 %1223, %v1191
        %v1225 = vpop.permute.xlu0 %1224
        %1227 = vset.pattern.permute.xlu0 1
        %1228 = vperm.xlu0 %1227, %v1192
        %v1229 = vpop.permute.xlu0 %1228
        %1231 = vset.pattern.permute.xlu0 1
        %1232 = vperm.xlu0 %1231, %v1193
        %v1233 = vpop.permute.xlu0 %1232
        %1235 = vset.pattern.permute.xlu0 1
        %1236 = vperm.xlu0 %1235, %v1194
        %v1237 = vpop.permute.xlu0 %1236
        %v1239 = vsub.f32 %v1225, %v281
        %v1240 = vsub.f32 %v1225, %v285
        %v1241 = vsub.f32 %v1229, %v281
        %v1242 = vsub.f32 %v1229, %v285
        %v1243 = vsub.f32 %v1233, %v281
        %v1244 = vsub.f32 %v1233, %v285
        %v1245 = vsub.f32 %v1237, %v281
        %v1246 = vsub.f32 %v1237, %v285
        %v1247 = vmul.f32 %v1215, %v1215
        %v1248 = vmul.f32 %v1216, %v1216
        %v1249 = vmul.f32 %v1217, %v1217
        %v1250 = vmul.f32 %v1218, %v1218
        %v1251 = vmul.f32 %v1219, %v1219
        %v1252 = vmul.f32 %v1220, %v1220
        %v1253 = vmul.f32 %v1221, %v1221
        %v1254 = vmul.f32 %v1222, %v1222
        %v1255 = vmul.f32 %v1239, %v1239
        %v1256 = vmul.f32 %v1240, %v1240
        %v1257 = vmul.f32 %v1241, %v1241
        %v1258 = vmul.f32 %v1242, %v1242
        %v1259 = vmul.f32 %v1243, %v1243
        %v1260 = vmul.f32 %v1244, %v1244
        %v1261 = vmul.f32 %v1245, %v1245
        %v1262 = vmul.f32 %v1246, %v1246
        %v1263 = vadd.f32 %v1247, %v1255
        %v1264 = vadd.f32 %v1248, %v1256
        %v1265 = vadd.f32 %v1249, %v1257
        %v1266 = vadd.f32 %v1250, %v1258
        %v1267 = vadd.f32 %v1251, %v1259
        %v1268 = vadd.f32 %v1252, %v1260
        %v1269 = vadd.f32 %v1253, %v1261
        %v1270 = vadd.f32 %v1254, %v1262
        %s1271 = scalar_lea.vmem %s214, 128
        %v1272 = vld [vmem:[%s1271] sm:$0xff]
        %v1273 = vld [vmem:[%s1271 + $0x8] sm:$0xff]
        %v1274 = vld [vmem:[%s1271 + $0x10] sm:$0xff]
        %v1275 = vld [vmem:[%s1271 + $0x18] sm:$0xff]
        %vm1276 = vcmp.gt.f32.partialorder %v1272, 0.5
        %vm1277 = vcmp.gt.f32.partialorder %v1273, 0.5
        %vm1278 = vcmp.gt.f32.partialorder %v1274, 0.5
        %vm1279 = vcmp.gt.f32.partialorder %v1275, 0.5
        %v1280 = vsel %vm1276, 1, 0
        %v1281 = vsel %vm1277, 1, 0
        %v1282 = vsel %vm1278, 1, 0
        %v1283 = vsel %vm1279, 1, 0
        %1284 = vset.pattern.permute.xlu0 0
        %1285 = vperm.xlu0 %1284, %v1280
        %v1286 = vpop.permute.xlu0 %1285
        %1287 = vset.pattern.permute.xlu0 0
        %1288 = vperm.xlu0 %1287, %v1281
        %v1289 = vpop.permute.xlu0 %1288
        %1290 = vset.pattern.permute.xlu0 0
        %1291 = vperm.xlu0 %1290, %v1282
        %v1292 = vpop.permute.xlu0 %1291
        %1293 = vset.pattern.permute.xlu0 0
        %1294 = vperm.xlu0 %1293, %v1283
        %v1295 = vpop.permute.xlu0 %1294
        %vm1296 = vcmp.eq.s32.totalorder %v1286, 1
        %vm1297 = vcmp.eq.s32.totalorder %v1289, 1
        %vm1298 = vcmp.eq.s32.totalorder %v1292, 1
        %vm1299 = vcmp.eq.s32.totalorder %v1295, 1
        %v1300 = vsel %vm1296, 1e+30, %v1263
        %v1301 = vsel %vm1296, 1e+30, %v1264
        %v1302 = vsel %vm1297, 1e+30, %v1265
        %v1303 = vsel %vm1297, 1e+30, %v1266
        %v1304 = vsel %vm1298, 1e+30, %v1267
        %v1305 = vsel %vm1298, 1e+30, %v1268
        %v1306 = vsel %vm1299, 1e+30, %v1269
        %v1307 = vsel %vm1299, 1e+30, %v1270
        %v1308 = vmin.f32 %v1300, %v1304
        %v1309 = vmin.f32 %v1302, %v1306
        %v1310 = vmin.f32 %v1308, %v1309
        %v1311 = vrot.slane %v1310, 4
        %v1312 = vmin.f32 %v1310, %v1311
        %v1313 = vrot.slane %v1312, 2
        %v1314 = vmin.f32 %v1312, %v1313
        %v1315 = vrot.slane %v1314, 1
        %v1316 = vmin.f32 %v1314, %v1315
        %v1317 = vmin.f32 %v1301, %v1305
        %v1318 = vmin.f32 %v1303, %v1307
        %v1319 = vmin.f32 %v1317, %v1318
        %v1320 = vrot.slane %v1319, 4
        %v1321 = vmin.f32 %v1319, %v1320
        %v1322 = vrot.slane %v1321, 2
        %v1323 = vmin.f32 %v1321, %v1322
        %v1324 = vrot.slane %v1323, 1
        %v1325 = vmin.f32 %v1323, %v1324
        %v1326 = vmin.f32 %v1088, %v1316
        %v1327 = vmin.f32 %v1089, %v1325
        %v1328 = vsel %vm1296, %v1263, 1e+30
        %v1329 = vsel %vm1296, %v1264, 1e+30
        %v1330 = vsel %vm1297, %v1265, 1e+30
        %v1331 = vsel %vm1297, %v1266, 1e+30
        %v1332 = vsel %vm1298, %v1267, 1e+30
        %v1333 = vsel %vm1298, %v1268, 1e+30
        %v1334 = vsel %vm1299, %v1269, 1e+30
        %v1335 = vsel %vm1299, %v1270, 1e+30
        %v1336 = vmin.f32 %v1328, %v1332
        %v1337 = vmin.f32 %v1330, %v1334
        %v1338 = vmin.f32 %v1336, %v1337
        %v1339 = vrot.slane %v1338, 4
        %v1340 = vmin.f32 %v1338, %v1339
        %v1341 = vrot.slane %v1340, 2
        %v1342 = vmin.f32 %v1340, %v1341
        %v1343 = vrot.slane %v1342, 1
        %v1344 = vmin.f32 %v1342, %v1343
        %v1345 = vmin.f32 %v1329, %v1333
        %v1346 = vmin.f32 %v1331, %v1335
        %v1347 = vmin.f32 %v1345, %v1346
        %v1348 = vrot.slane %v1347, 4
        %v1349 = vmin.f32 %v1347, %v1348
        %v1350 = vrot.slane %v1349, 2
        %v1351 = vmin.f32 %v1349, %v1350
        %v1352 = vrot.slane %v1351, 1
        %v1353 = vmin.f32 %v1351, %v1352
        %v1354 = vmin.f32 %v1116, %v1344
        %v1355 = vmin.f32 %v1117, %v1353
        %1356 = vset.pattern.permute.xlu0 1
        %1357 = vperm.xlu0 %1356, %v1280
        %v1358 = vpop.permute.xlu0 %1357
        %1359 = vset.pattern.permute.xlu0 1
        %1360 = vperm.xlu0 %1359, %v1281
        %v1361 = vpop.permute.xlu0 %1360
        %1362 = vset.pattern.permute.xlu0 1
        %1363 = vperm.xlu0 %1362, %v1282
        %v1364 = vpop.permute.xlu0 %1363
        %1365 = vset.pattern.permute.xlu0 1
        %1366 = vperm.xlu0 %1365, %v1283
        %v1367 = vpop.permute.xlu0 %1366
        %vm1368 = vcmp.eq.s32.totalorder %v1358, 1
        %vm1369 = vcmp.eq.s32.totalorder %v1361, 1
        %vm1370 = vcmp.eq.s32.totalorder %v1364, 1
        %vm1371 = vcmp.eq.s32.totalorder %v1367, 1
        %v1372 = vsel %vm1368, 1e+30, %v1263
        %v1373 = vsel %vm1368, 1e+30, %v1264
        %v1374 = vsel %vm1369, 1e+30, %v1265
        %v1375 = vsel %vm1369, 1e+30, %v1266
        %v1376 = vsel %vm1370, 1e+30, %v1267
        %v1377 = vsel %vm1370, 1e+30, %v1268
        %v1378 = vsel %vm1371, 1e+30, %v1269
        %v1379 = vsel %vm1371, 1e+30, %v1270
        %v1380 = vmin.f32 %v1372, %v1376
        %v1381 = vmin.f32 %v1374, %v1378
        %v1382 = vmin.f32 %v1380, %v1381
        %v1383 = vrot.slane %v1382, 4
        %v1384 = vmin.f32 %v1382, %v1383
        %v1385 = vrot.slane %v1384, 2
        %v1386 = vmin.f32 %v1384, %v1385
        %v1387 = vrot.slane %v1386, 1
        %v1388 = vmin.f32 %v1386, %v1387
        %v1389 = vmin.f32 %v1373, %v1377
        %v1390 = vmin.f32 %v1375, %v1379
        %v1391 = vmin.f32 %v1389, %v1390
        %v1392 = vrot.slane %v1391, 4
        %v1393 = vmin.f32 %v1391, %v1392
        %v1394 = vrot.slane %v1393, 2
        %v1395 = vmin.f32 %v1393, %v1394
        %v1396 = vrot.slane %v1395, 1
        %v1397 = vmin.f32 %v1395, %v1396
        %v1398 = vmin.f32 %v1160, %v1388
        %v1399 = vmin.f32 %v1161, %v1397
        %v1400 = vsel %vm1368, %v1263, 1e+30
        %v1401 = vsel %vm1368, %v1264, 1e+30
        %v1402 = vsel %vm1369, %v1265, 1e+30
        %v1403 = vsel %vm1369, %v1266, 1e+30
        %v1404 = vsel %vm1370, %v1267, 1e+30
        %v1405 = vsel %vm1370, %v1268, 1e+30
        %v1406 = vsel %vm1371, %v1269, 1e+30
        %v1407 = vsel %vm1371, %v1270, 1e+30
        %v1408 = vmin.f32 %v1400, %v1404
        %v1409 = vmin.f32 %v1402, %v1406
        %v1410 = vmin.f32 %v1408, %v1409
        %v1411 = vrot.slane %v1410, 4
        %v1412 = vmin.f32 %v1410, %v1411
        %v1413 = vrot.slane %v1412, 2
        %v1414 = vmin.f32 %v1412, %v1413
        %v1415 = vrot.slane %v1414, 1
        %v1416 = vmin.f32 %v1414, %v1415
        %v1417 = vmin.f32 %v1401, %v1405
        %v1418 = vmin.f32 %v1403, %v1407
        %v1419 = vmin.f32 %v1417, %v1418
        %v1420 = vrot.slane %v1419, 4
        %v1421 = vmin.f32 %v1419, %v1420
        %v1422 = vrot.slane %v1421, 2
        %v1423 = vmin.f32 %v1421, %v1422
        %v1424 = vrot.slane %v1423, 1
        %v1425 = vmin.f32 %v1423, %v1424
        %v1426 = vmin.f32 %v1188, %v1416
        %v1427 = vmin.f32 %v1189, %v1425
        %s1428 = scalar_lea.vmem %s1, 160
        %v1429 = vld [vmem:[%s1428] sm:$0xff]
        %v1430 = vld [vmem:[%s1428 + $0x8] sm:$0xff]
        %v1431 = vld [vmem:[%s1428 + $0x10] sm:$0xff]
        %v1432 = vld [vmem:[%s1428 + $0x18] sm:$0xff]
        %1434 = vset.pattern.permute.xlu0 0
        %1435 = vperm.xlu0 %1434, %v1429
        %v1436 = vpop.permute.xlu0 %1435
        %1439 = vset.pattern.permute.xlu0 0
        %1440 = vperm.xlu0 %1439, %v1430
        %v1441 = vpop.permute.xlu0 %1440
        %1444 = vset.pattern.permute.xlu0 0
        %1445 = vperm.xlu0 %1444, %v1431
        %v1446 = vpop.permute.xlu0 %1445
        %1449 = vset.pattern.permute.xlu0 0
        %1450 = vperm.xlu0 %1449, %v1432
        %v1451 = vpop.permute.xlu0 %1450
        %v1453 = vsub.f32 %v1436, %v246
        %v1454 = vsub.f32 %v1436, %v250
        %v1455 = vsub.f32 %v1441, %v246
        %v1456 = vsub.f32 %v1441, %v250
        %v1457 = vsub.f32 %v1446, %v246
        %v1458 = vsub.f32 %v1446, %v250
        %v1459 = vsub.f32 %v1451, %v246
        %v1460 = vsub.f32 %v1451, %v250
        %1461 = vset.pattern.permute.xlu0 1
        %1462 = vperm.xlu0 %1461, %v1429
        %v1463 = vpop.permute.xlu0 %1462
        %1465 = vset.pattern.permute.xlu0 1
        %1466 = vperm.xlu0 %1465, %v1430
        %v1467 = vpop.permute.xlu0 %1466
        %1469 = vset.pattern.permute.xlu0 1
        %1470 = vperm.xlu0 %1469, %v1431
        %v1471 = vpop.permute.xlu0 %1470
        %1473 = vset.pattern.permute.xlu0 1
        %1474 = vperm.xlu0 %1473, %v1432
        %v1475 = vpop.permute.xlu0 %1474
        %v1477 = vsub.f32 %v1463, %v281
        %v1478 = vsub.f32 %v1463, %v285
        %v1479 = vsub.f32 %v1467, %v281
        %v1480 = vsub.f32 %v1467, %v285
        %v1481 = vsub.f32 %v1471, %v281
        %v1482 = vsub.f32 %v1471, %v285
        %v1483 = vsub.f32 %v1475, %v281
        %v1484 = vsub.f32 %v1475, %v285
        %v1485 = vmul.f32 %v1453, %v1453
        %v1486 = vmul.f32 %v1454, %v1454
        %v1487 = vmul.f32 %v1455, %v1455
        %v1488 = vmul.f32 %v1456, %v1456
        %v1489 = vmul.f32 %v1457, %v1457
        %v1490 = vmul.f32 %v1458, %v1458
        %v1491 = vmul.f32 %v1459, %v1459
        %v1492 = vmul.f32 %v1460, %v1460
        %v1493 = vmul.f32 %v1477, %v1477
        %v1494 = vmul.f32 %v1478, %v1478
        %v1495 = vmul.f32 %v1479, %v1479
        %v1496 = vmul.f32 %v1480, %v1480
        %v1497 = vmul.f32 %v1481, %v1481
        %v1498 = vmul.f32 %v1482, %v1482
        %v1499 = vmul.f32 %v1483, %v1483
        %v1500 = vmul.f32 %v1484, %v1484
        %v1501 = vadd.f32 %v1485, %v1493
        %v1502 = vadd.f32 %v1486, %v1494
        %v1503 = vadd.f32 %v1487, %v1495
        %v1504 = vadd.f32 %v1488, %v1496
        %v1505 = vadd.f32 %v1489, %v1497
        %v1506 = vadd.f32 %v1490, %v1498
        %v1507 = vadd.f32 %v1491, %v1499
        %v1508 = vadd.f32 %v1492, %v1500
        %s1509 = scalar_lea.vmem %s214, 160
        %v1510 = vld [vmem:[%s1509] sm:$0xff]
        %v1511 = vld [vmem:[%s1509 + $0x8] sm:$0xff]
        %v1512 = vld [vmem:[%s1509 + $0x10] sm:$0xff]
        %v1513 = vld [vmem:[%s1509 + $0x18] sm:$0xff]
        %vm1514 = vcmp.gt.f32.partialorder %v1510, 0.5
        %vm1515 = vcmp.gt.f32.partialorder %v1511, 0.5
        %vm1516 = vcmp.gt.f32.partialorder %v1512, 0.5
        %vm1517 = vcmp.gt.f32.partialorder %v1513, 0.5
        %v1518 = vsel %vm1514, 1, 0
        %v1519 = vsel %vm1515, 1, 0
        %v1520 = vsel %vm1516, 1, 0
        %v1521 = vsel %vm1517, 1, 0
        %1522 = vset.pattern.permute.xlu0 0
        %1523 = vperm.xlu0 %1522, %v1518
        %v1524 = vpop.permute.xlu0 %1523
        %1525 = vset.pattern.permute.xlu0 0
        %1526 = vperm.xlu0 %1525, %v1519
        %v1527 = vpop.permute.xlu0 %1526
        %1528 = vset.pattern.permute.xlu0 0
        %1529 = vperm.xlu0 %1528, %v1520
        %v1530 = vpop.permute.xlu0 %1529
        %1531 = vset.pattern.permute.xlu0 0
        %1532 = vperm.xlu0 %1531, %v1521
        %v1533 = vpop.permute.xlu0 %1532
        %vm1534 = vcmp.eq.s32.totalorder %v1524, 1
        %vm1535 = vcmp.eq.s32.totalorder %v1527, 1
        %vm1536 = vcmp.eq.s32.totalorder %v1530, 1
        %vm1537 = vcmp.eq.s32.totalorder %v1533, 1
        %v1538 = vsel %vm1534, 1e+30, %v1501
        %v1539 = vsel %vm1534, 1e+30, %v1502
        %v1540 = vsel %vm1535, 1e+30, %v1503
        %v1541 = vsel %vm1535, 1e+30, %v1504
        %v1542 = vsel %vm1536, 1e+30, %v1505
        %v1543 = vsel %vm1536, 1e+30, %v1506
        %v1544 = vsel %vm1537, 1e+30, %v1507
        %v1545 = vsel %vm1537, 1e+30, %v1508
        %v1546 = vmin.f32 %v1538, %v1542
        %v1547 = vmin.f32 %v1540, %v1544
        %v1548 = vmin.f32 %v1546, %v1547
        %v1549 = vrot.slane %v1548, 4
        %v1550 = vmin.f32 %v1548, %v1549
        %v1551 = vrot.slane %v1550, 2
        %v1552 = vmin.f32 %v1550, %v1551
        %v1553 = vrot.slane %v1552, 1
        %v1554 = vmin.f32 %v1552, %v1553
        %v1555 = vmin.f32 %v1539, %v1543
        %v1556 = vmin.f32 %v1541, %v1545
        %v1557 = vmin.f32 %v1555, %v1556
        %v1558 = vrot.slane %v1557, 4
        %v1559 = vmin.f32 %v1557, %v1558
        %v1560 = vrot.slane %v1559, 2
        %v1561 = vmin.f32 %v1559, %v1560
        %v1562 = vrot.slane %v1561, 1
        %v1563 = vmin.f32 %v1561, %v1562
        %v1564 = vmin.f32 %v1326, %v1554
        %v1565 = vmin.f32 %v1327, %v1563
        %v1566 = vsel %vm1534, %v1501, 1e+30
        %v1567 = vsel %vm1534, %v1502, 1e+30
        %v1568 = vsel %vm1535, %v1503, 1e+30
        %v1569 = vsel %vm1535, %v1504, 1e+30
        %v1570 = vsel %vm1536, %v1505, 1e+30
        %v1571 = vsel %vm1536, %v1506, 1e+30
        %v1572 = vsel %vm1537, %v1507, 1e+30
        %v1573 = vsel %vm1537, %v1508, 1e+30
        %v1574 = vmin.f32 %v1566, %v1570
        %v1575 = vmin.f32 %v1568, %v1572
        %v1576 = vmin.f32 %v1574, %v1575
        %v1577 = vrot.slane %v1576, 4
        %v1578 = vmin.f32 %v1576, %v1577
        %v1579 = vrot.slane %v1578, 2
        %v1580 = vmin.f32 %v1578, %v1579
        %v1581 = vrot.slane %v1580, 1
        %v1582 = vmin.f32 %v1580, %v1581
        %v1583 = vmin.f32 %v1567, %v1571
        %v1584 = vmin.f32 %v1569, %v1573
        %v1585 = vmin.f32 %v1583, %v1584
        %v1586 = vrot.slane %v1585, 4
        %v1587 = vmin.f32 %v1585, %v1586
        %v1588 = vrot.slane %v1587, 2
        %v1589 = vmin.f32 %v1587, %v1588
        %v1590 = vrot.slane %v1589, 1
        %v1591 = vmin.f32 %v1589, %v1590
        %v1592 = vmin.f32 %v1354, %v1582
        %v1593 = vmin.f32 %v1355, %v1591
        %1594 = vset.pattern.permute.xlu0 1
        %1595 = vperm.xlu0 %1594, %v1518
        %v1596 = vpop.permute.xlu0 %1595
        %1597 = vset.pattern.permute.xlu0 1
        %1598 = vperm.xlu0 %1597, %v1519
        %v1599 = vpop.permute.xlu0 %1598
        %1600 = vset.pattern.permute.xlu0 1
        %1601 = vperm.xlu0 %1600, %v1520
        %v1602 = vpop.permute.xlu0 %1601
        %1603 = vset.pattern.permute.xlu0 1
        %1604 = vperm.xlu0 %1603, %v1521
        %v1605 = vpop.permute.xlu0 %1604
        %vm1606 = vcmp.eq.s32.totalorder %v1596, 1
        %vm1607 = vcmp.eq.s32.totalorder %v1599, 1
        %vm1608 = vcmp.eq.s32.totalorder %v1602, 1
        %vm1609 = vcmp.eq.s32.totalorder %v1605, 1
        %v1610 = vsel %vm1606, 1e+30, %v1501
        %v1611 = vsel %vm1606, 1e+30, %v1502
        %v1612 = vsel %vm1607, 1e+30, %v1503
        %v1613 = vsel %vm1607, 1e+30, %v1504
        %v1614 = vsel %vm1608, 1e+30, %v1505
        %v1615 = vsel %vm1608, 1e+30, %v1506
        %v1616 = vsel %vm1609, 1e+30, %v1507
        %v1617 = vsel %vm1609, 1e+30, %v1508
        %v1618 = vmin.f32 %v1610, %v1614
        %v1619 = vmin.f32 %v1612, %v1616
        %v1620 = vmin.f32 %v1618, %v1619
        %v1621 = vrot.slane %v1620, 4
        %v1622 = vmin.f32 %v1620, %v1621
        %v1623 = vrot.slane %v1622, 2
        %v1624 = vmin.f32 %v1622, %v1623
        %v1625 = vrot.slane %v1624, 1
        %v1626 = vmin.f32 %v1624, %v1625
        %v1627 = vmin.f32 %v1611, %v1615
        %v1628 = vmin.f32 %v1613, %v1617
        %v1629 = vmin.f32 %v1627, %v1628
        %v1630 = vrot.slane %v1629, 4
        %v1631 = vmin.f32 %v1629, %v1630
        %v1632 = vrot.slane %v1631, 2
        %v1633 = vmin.f32 %v1631, %v1632
        %v1634 = vrot.slane %v1633, 1
        %v1635 = vmin.f32 %v1633, %v1634
        %v1636 = vmin.f32 %v1398, %v1626
        %v1637 = vmin.f32 %v1399, %v1635
        %v1638 = vsel %vm1606, %v1501, 1e+30
        %v1639 = vsel %vm1606, %v1502, 1e+30
        %v1640 = vsel %vm1607, %v1503, 1e+30
        %v1641 = vsel %vm1607, %v1504, 1e+30
        %v1642 = vsel %vm1608, %v1505, 1e+30
        %v1643 = vsel %vm1608, %v1506, 1e+30
        %v1644 = vsel %vm1609, %v1507, 1e+30
        %v1645 = vsel %vm1609, %v1508, 1e+30
        %v1646 = vmin.f32 %v1638, %v1642
        %v1647 = vmin.f32 %v1640, %v1644
        %v1648 = vmin.f32 %v1646, %v1647
        %v1649 = vrot.slane %v1648, 4
        %v1650 = vmin.f32 %v1648, %v1649
        %v1651 = vrot.slane %v1650, 2
        %v1652 = vmin.f32 %v1650, %v1651
        %v1653 = vrot.slane %v1652, 1
        %v1654 = vmin.f32 %v1652, %v1653
        %v1655 = vmin.f32 %v1639, %v1643
        %v1656 = vmin.f32 %v1641, %v1645
        %v1657 = vmin.f32 %v1655, %v1656
        %v1658 = vrot.slane %v1657, 4
        %v1659 = vmin.f32 %v1657, %v1658
        %v1660 = vrot.slane %v1659, 2
        %v1661 = vmin.f32 %v1659, %v1660
        %v1662 = vrot.slane %v1661, 1
        %v1663 = vmin.f32 %v1661, %v1662
        %v1664 = vmin.f32 %v1426, %v1654
        %v1665 = vmin.f32 %v1427, %v1663
        %s1666 = scalar_lea.vmem %s1, 192
        %v1667 = vld [vmem:[%s1666] sm:$0xff]
        %v1668 = vld [vmem:[%s1666 + $0x8] sm:$0xff]
        %v1669 = vld [vmem:[%s1666 + $0x10] sm:$0xff]
        %v1670 = vld [vmem:[%s1666 + $0x18] sm:$0xff]
        %1672 = vset.pattern.permute.xlu0 0
        %1673 = vperm.xlu0 %1672, %v1667
        %v1674 = vpop.permute.xlu0 %1673
        %1677 = vset.pattern.permute.xlu0 0
        %1678 = vperm.xlu0 %1677, %v1668
        %v1679 = vpop.permute.xlu0 %1678
        %1682 = vset.pattern.permute.xlu0 0
        %1683 = vperm.xlu0 %1682, %v1669
        %v1684 = vpop.permute.xlu0 %1683
        %1687 = vset.pattern.permute.xlu0 0
        %1688 = vperm.xlu0 %1687, %v1670
        %v1689 = vpop.permute.xlu0 %1688
        %v1691 = vsub.f32 %v1674, %v246
        %v1692 = vsub.f32 %v1674, %v250
        %v1693 = vsub.f32 %v1679, %v246
        %v1694 = vsub.f32 %v1679, %v250
        %v1695 = vsub.f32 %v1684, %v246
        %v1696 = vsub.f32 %v1684, %v250
        %v1697 = vsub.f32 %v1689, %v246
        %v1698 = vsub.f32 %v1689, %v250
        %1699 = vset.pattern.permute.xlu0 1
        %1700 = vperm.xlu0 %1699, %v1667
        %v1701 = vpop.permute.xlu0 %1700
        %1703 = vset.pattern.permute.xlu0 1
        %1704 = vperm.xlu0 %1703, %v1668
        %v1705 = vpop.permute.xlu0 %1704
        %1707 = vset.pattern.permute.xlu0 1
        %1708 = vperm.xlu0 %1707, %v1669
        %v1709 = vpop.permute.xlu0 %1708
        %1711 = vset.pattern.permute.xlu0 1
        %1712 = vperm.xlu0 %1711, %v1670
        %v1713 = vpop.permute.xlu0 %1712
        %v1715 = vsub.f32 %v1701, %v281
        %v1716 = vsub.f32 %v1701, %v285
        %v1717 = vsub.f32 %v1705, %v281
        %v1718 = vsub.f32 %v1705, %v285
        %v1719 = vsub.f32 %v1709, %v281
        %v1720 = vsub.f32 %v1709, %v285
        %v1721 = vsub.f32 %v1713, %v281
        %v1722 = vsub.f32 %v1713, %v285
        %v1723 = vmul.f32 %v1691, %v1691
        %v1724 = vmul.f32 %v1692, %v1692
        %v1725 = vmul.f32 %v1693, %v1693
        %v1726 = vmul.f32 %v1694, %v1694
        %v1727 = vmul.f32 %v1695, %v1695
        %v1728 = vmul.f32 %v1696, %v1696
        %v1729 = vmul.f32 %v1697, %v1697
        %v1730 = vmul.f32 %v1698, %v1698
        %v1731 = vmul.f32 %v1715, %v1715
        %v1732 = vmul.f32 %v1716, %v1716
        %v1733 = vmul.f32 %v1717, %v1717
        %v1734 = vmul.f32 %v1718, %v1718
        %v1735 = vmul.f32 %v1719, %v1719
        %v1736 = vmul.f32 %v1720, %v1720
        %v1737 = vmul.f32 %v1721, %v1721
        %v1738 = vmul.f32 %v1722, %v1722
        %v1739 = vadd.f32 %v1723, %v1731
        %v1740 = vadd.f32 %v1724, %v1732
        %v1741 = vadd.f32 %v1725, %v1733
        %v1742 = vadd.f32 %v1726, %v1734
        %v1743 = vadd.f32 %v1727, %v1735
        %v1744 = vadd.f32 %v1728, %v1736
        %v1745 = vadd.f32 %v1729, %v1737
        %v1746 = vadd.f32 %v1730, %v1738
        %s1747 = scalar_lea.vmem %s214, 192
        %v1748 = vld [vmem:[%s1747] sm:$0xff]
        %v1749 = vld [vmem:[%s1747 + $0x8] sm:$0xff]
        %v1750 = vld [vmem:[%s1747 + $0x10] sm:$0xff]
        %v1751 = vld [vmem:[%s1747 + $0x18] sm:$0xff]
        %vm1752 = vcmp.gt.f32.partialorder %v1748, 0.5
        %vm1753 = vcmp.gt.f32.partialorder %v1749, 0.5
        %vm1754 = vcmp.gt.f32.partialorder %v1750, 0.5
        %vm1755 = vcmp.gt.f32.partialorder %v1751, 0.5
        %v1756 = vsel %vm1752, 1, 0
        %v1757 = vsel %vm1753, 1, 0
        %v1758 = vsel %vm1754, 1, 0
        %v1759 = vsel %vm1755, 1, 0
        %1760 = vset.pattern.permute.xlu0 0
        %1761 = vperm.xlu0 %1760, %v1756
        %v1762 = vpop.permute.xlu0 %1761
        %1763 = vset.pattern.permute.xlu0 0
        %1764 = vperm.xlu0 %1763, %v1757
        %v1765 = vpop.permute.xlu0 %1764
        %1766 = vset.pattern.permute.xlu0 0
        %1767 = vperm.xlu0 %1766, %v1758
        %v1768 = vpop.permute.xlu0 %1767
        %1769 = vset.pattern.permute.xlu0 0
        %1770 = vperm.xlu0 %1769, %v1759
        %v1771 = vpop.permute.xlu0 %1770
        %vm1772 = vcmp.eq.s32.totalorder %v1762, 1
        %vm1773 = vcmp.eq.s32.totalorder %v1765, 1
        %vm1774 = vcmp.eq.s32.totalorder %v1768, 1
        %vm1775 = vcmp.eq.s32.totalorder %v1771, 1
        %v1776 = vsel %vm1772, 1e+30, %v1739
        %v1777 = vsel %vm1772, 1e+30, %v1740
        %v1778 = vsel %vm1773, 1e+30, %v1741
        %v1779 = vsel %vm1773, 1e+30, %v1742
        %v1780 = vsel %vm1774, 1e+30, %v1743
        %v1781 = vsel %vm1774, 1e+30, %v1744
        %v1782 = vsel %vm1775, 1e+30, %v1745
        %v1783 = vsel %vm1775, 1e+30, %v1746
        %v1784 = vmin.f32 %v1776, %v1780
        %v1785 = vmin.f32 %v1778, %v1782
        %v1786 = vmin.f32 %v1784, %v1785
        %v1787 = vrot.slane %v1786, 4
        %v1788 = vmin.f32 %v1786, %v1787
        %v1789 = vrot.slane %v1788, 2
        %v1790 = vmin.f32 %v1788, %v1789
        %v1791 = vrot.slane %v1790, 1
        %v1792 = vmin.f32 %v1790, %v1791
        %v1793 = vmin.f32 %v1777, %v1781
        %v1794 = vmin.f32 %v1779, %v1783
        %v1795 = vmin.f32 %v1793, %v1794
        %v1796 = vrot.slane %v1795, 4
        %v1797 = vmin.f32 %v1795, %v1796
        %v1798 = vrot.slane %v1797, 2
        %v1799 = vmin.f32 %v1797, %v1798
        %v1800 = vrot.slane %v1799, 1
        %v1801 = vmin.f32 %v1799, %v1800
        %v1802 = vmin.f32 %v1564, %v1792
        %v1803 = vmin.f32 %v1565, %v1801
        %v1804 = vsel %vm1772, %v1739, 1e+30
        %v1805 = vsel %vm1772, %v1740, 1e+30
        %v1806 = vsel %vm1773, %v1741, 1e+30
        %v1807 = vsel %vm1773, %v1742, 1e+30
        %v1808 = vsel %vm1774, %v1743, 1e+30
        %v1809 = vsel %vm1774, %v1744, 1e+30
        %v1810 = vsel %vm1775, %v1745, 1e+30
        %v1811 = vsel %vm1775, %v1746, 1e+30
        %v1812 = vmin.f32 %v1804, %v1808
        %v1813 = vmin.f32 %v1806, %v1810
        %v1814 = vmin.f32 %v1812, %v1813
        %v1815 = vrot.slane %v1814, 4
        %v1816 = vmin.f32 %v1814, %v1815
        %v1817 = vrot.slane %v1816, 2
        %v1818 = vmin.f32 %v1816, %v1817
        %v1819 = vrot.slane %v1818, 1
        %v1820 = vmin.f32 %v1818, %v1819
        %v1821 = vmin.f32 %v1805, %v1809
        %v1822 = vmin.f32 %v1807, %v1811
        %v1823 = vmin.f32 %v1821, %v1822
        %v1824 = vrot.slane %v1823, 4
        %v1825 = vmin.f32 %v1823, %v1824
        %v1826 = vrot.slane %v1825, 2
        %v1827 = vmin.f32 %v1825, %v1826
        %v1828 = vrot.slane %v1827, 1
        %v1829 = vmin.f32 %v1827, %v1828
        %v1830 = vmin.f32 %v1592, %v1820
        %v1831 = vmin.f32 %v1593, %v1829
        %1832 = vset.pattern.permute.xlu0 1
        %1833 = vperm.xlu0 %1832, %v1756
        %v1834 = vpop.permute.xlu0 %1833
        %1835 = vset.pattern.permute.xlu0 1
        %1836 = vperm.xlu0 %1835, %v1757
        %v1837 = vpop.permute.xlu0 %1836
        %1838 = vset.pattern.permute.xlu0 1
        %1839 = vperm.xlu0 %1838, %v1758
        %v1840 = vpop.permute.xlu0 %1839
        %1841 = vset.pattern.permute.xlu0 1
        %1842 = vperm.xlu0 %1841, %v1759
        %v1843 = vpop.permute.xlu0 %1842
        %vm1844 = vcmp.eq.s32.totalorder %v1834, 1
        %vm1845 = vcmp.eq.s32.totalorder %v1837, 1
        %vm1846 = vcmp.eq.s32.totalorder %v1840, 1
        %vm1847 = vcmp.eq.s32.totalorder %v1843, 1
        %v1848 = vsel %vm1844, 1e+30, %v1739
        %v1849 = vsel %vm1844, 1e+30, %v1740
        %v1850 = vsel %vm1845, 1e+30, %v1741
        %v1851 = vsel %vm1845, 1e+30, %v1742
        %v1852 = vsel %vm1846, 1e+30, %v1743
        %v1853 = vsel %vm1846, 1e+30, %v1744
        %v1854 = vsel %vm1847, 1e+30, %v1745
        %v1855 = vsel %vm1847, 1e+30, %v1746
        %v1856 = vmin.f32 %v1848, %v1852
        %v1857 = vmin.f32 %v1850, %v1854
        %v1858 = vmin.f32 %v1856, %v1857
        %v1859 = vrot.slane %v1858, 4
        %v1860 = vmin.f32 %v1858, %v1859
        %v1861 = vrot.slane %v1860, 2
        %v1862 = vmin.f32 %v1860, %v1861
        %v1863 = vrot.slane %v1862, 1
        %v1864 = vmin.f32 %v1862, %v1863
        %v1865 = vmin.f32 %v1849, %v1853
        %v1866 = vmin.f32 %v1851, %v1855
        %v1867 = vmin.f32 %v1865, %v1866
        %v1868 = vrot.slane %v1867, 4
        %v1869 = vmin.f32 %v1867, %v1868
        %v1870 = vrot.slane %v1869, 2
        %v1871 = vmin.f32 %v1869, %v1870
        %v1872 = vrot.slane %v1871, 1
        %v1873 = vmin.f32 %v1871, %v1872
        %v1874 = vmin.f32 %v1636, %v1864
        %v1875 = vmin.f32 %v1637, %v1873
        %v1876 = vsel %vm1844, %v1739, 1e+30
        %v1877 = vsel %vm1844, %v1740, 1e+30
        %v1878 = vsel %vm1845, %v1741, 1e+30
        %v1879 = vsel %vm1845, %v1742, 1e+30
        %v1880 = vsel %vm1846, %v1743, 1e+30
        %v1881 = vsel %vm1846, %v1744, 1e+30
        %v1882 = vsel %vm1847, %v1745, 1e+30
        %v1883 = vsel %vm1847, %v1746, 1e+30
        %v1884 = vmin.f32 %v1876, %v1880
        %v1885 = vmin.f32 %v1878, %v1882
        %v1886 = vmin.f32 %v1884, %v1885
        %v1887 = vrot.slane %v1886, 4
        %v1888 = vmin.f32 %v1886, %v1887
        %v1889 = vrot.slane %v1888, 2
        %v1890 = vmin.f32 %v1888, %v1889
        %v1891 = vrot.slane %v1890, 1
        %v1892 = vmin.f32 %v1890, %v1891
        %v1893 = vmin.f32 %v1877, %v1881
        %v1894 = vmin.f32 %v1879, %v1883
        %v1895 = vmin.f32 %v1893, %v1894
        %v1896 = vrot.slane %v1895, 4
        %v1897 = vmin.f32 %v1895, %v1896
        %v1898 = vrot.slane %v1897, 2
        %v1899 = vmin.f32 %v1897, %v1898
        %v1900 = vrot.slane %v1899, 1
        %v1901 = vmin.f32 %v1899, %v1900
        %v1902 = vmin.f32 %v1664, %v1892
        %v1903 = vmin.f32 %v1665, %v1901
        %s1904 = scalar_lea.vmem %s1, 224
        %v1905 = vld [vmem:[%s1904] sm:$0xff]
        %v1906 = vld [vmem:[%s1904 + $0x8] sm:$0xff]
        %v1907 = vld [vmem:[%s1904 + $0x10] sm:$0xff]
        %v1908 = vld [vmem:[%s1904 + $0x18] sm:$0xff]
        %1910 = vset.pattern.permute.xlu0 0
        %1911 = vperm.xlu0 %1910, %v1905
        %v1912 = vpop.permute.xlu0 %1911
        %1915 = vset.pattern.permute.xlu0 0
        %1916 = vperm.xlu0 %1915, %v1906
        %v1917 = vpop.permute.xlu0 %1916
        %1920 = vset.pattern.permute.xlu0 0
        %1921 = vperm.xlu0 %1920, %v1907
        %v1922 = vpop.permute.xlu0 %1921
        %1925 = vset.pattern.permute.xlu0 0
        %1926 = vperm.xlu0 %1925, %v1908
        %v1927 = vpop.permute.xlu0 %1926
        %v1929 = vsub.f32 %v1912, %v246
        %v1930 = vsub.f32 %v1912, %v250
        %v1931 = vsub.f32 %v1917, %v246
        %v1932 = vsub.f32 %v1917, %v250
        %v1933 = vsub.f32 %v1922, %v246
        %v1934 = vsub.f32 %v1922, %v250
        %v1935 = vsub.f32 %v1927, %v246
        %v1936 = vsub.f32 %v1927, %v250
        %1937 = vset.pattern.permute.xlu0 1
        %1938 = vperm.xlu0 %1937, %v1905
        %v1939 = vpop.permute.xlu0 %1938
        %1941 = vset.pattern.permute.xlu0 1
        %1942 = vperm.xlu0 %1941, %v1906
        %v1943 = vpop.permute.xlu0 %1942
        %1945 = vset.pattern.permute.xlu0 1
        %1946 = vperm.xlu0 %1945, %v1907
        %v1947 = vpop.permute.xlu0 %1946
        %1949 = vset.pattern.permute.xlu0 1
        %1950 = vperm.xlu0 %1949, %v1908
        %v1951 = vpop.permute.xlu0 %1950
        %v1953 = vsub.f32 %v1939, %v281
        %v1954 = vsub.f32 %v1939, %v285
        %v1955 = vsub.f32 %v1943, %v281
        %v1956 = vsub.f32 %v1943, %v285
        %v1957 = vsub.f32 %v1947, %v281
        %v1958 = vsub.f32 %v1947, %v285
        %v1959 = vsub.f32 %v1951, %v281
        %v1960 = vsub.f32 %v1951, %v285
        %v1961 = vmul.f32 %v1929, %v1929
        %v1962 = vmul.f32 %v1930, %v1930
        %v1963 = vmul.f32 %v1931, %v1931
        %v1964 = vmul.f32 %v1932, %v1932
        %v1965 = vmul.f32 %v1933, %v1933
        %v1966 = vmul.f32 %v1934, %v1934
        %v1967 = vmul.f32 %v1935, %v1935
        %v1968 = vmul.f32 %v1936, %v1936
        %v1969 = vmul.f32 %v1953, %v1953
        %v1970 = vmul.f32 %v1954, %v1954
        %v1971 = vmul.f32 %v1955, %v1955
        %v1972 = vmul.f32 %v1956, %v1956
        %v1973 = vmul.f32 %v1957, %v1957
        %v1974 = vmul.f32 %v1958, %v1958
        %v1975 = vmul.f32 %v1959, %v1959
        %v1976 = vmul.f32 %v1960, %v1960
        %v1977 = vadd.f32 %v1961, %v1969
        %v1978 = vadd.f32 %v1962, %v1970
        %v1979 = vadd.f32 %v1963, %v1971
        %v1980 = vadd.f32 %v1964, %v1972
        %v1981 = vadd.f32 %v1965, %v1973
        %v1982 = vadd.f32 %v1966, %v1974
        %v1983 = vadd.f32 %v1967, %v1975
        %v1984 = vadd.f32 %v1968, %v1976
        %s1985 = scalar_lea.vmem %s214, 224
        %v1986 = vld [vmem:[%s1985] sm:$0xff]
        %v1987 = vld [vmem:[%s1985 + $0x8] sm:$0xff]
        %v1988 = vld [vmem:[%s1985 + $0x10] sm:$0xff]
        %v1989 = vld [vmem:[%s1985 + $0x18] sm:$0xff]
        %vm1990 = vcmp.gt.f32.partialorder %v1986, 0.5
        %vm1991 = vcmp.gt.f32.partialorder %v1987, 0.5
        %vm1992 = vcmp.gt.f32.partialorder %v1988, 0.5
        %vm1993 = vcmp.gt.f32.partialorder %v1989, 0.5
        %v1994 = vsel %vm1990, 1, 0
        %v1995 = vsel %vm1991, 1, 0
        %v1996 = vsel %vm1992, 1, 0
        %v1997 = vsel %vm1993, 1, 0
        %1998 = vset.pattern.permute.xlu0 0
        %1999 = vperm.xlu0 %1998, %v1994
        %v2000 = vpop.permute.xlu0 %1999
        %2001 = vset.pattern.permute.xlu0 0
        %2002 = vperm.xlu0 %2001, %v1995
        %v2003 = vpop.permute.xlu0 %2002
        %2004 = vset.pattern.permute.xlu0 0
        %2005 = vperm.xlu0 %2004, %v1996
        %v2006 = vpop.permute.xlu0 %2005
        %2007 = vset.pattern.permute.xlu0 0
        %2008 = vperm.xlu0 %2007, %v1997
        %v2009 = vpop.permute.xlu0 %2008
        %vm2010 = vcmp.eq.s32.totalorder %v2000, 1
        %vm2011 = vcmp.eq.s32.totalorder %v2003, 1
        %vm2012 = vcmp.eq.s32.totalorder %v2006, 1
        %vm2013 = vcmp.eq.s32.totalorder %v2009, 1
        %v2014 = vsel %vm2010, 1e+30, %v1977
        %v2015 = vsel %vm2010, 1e+30, %v1978
        %v2016 = vsel %vm2011, 1e+30, %v1979
        %v2017 = vsel %vm2011, 1e+30, %v1980
        %v2018 = vsel %vm2012, 1e+30, %v1981
        %v2019 = vsel %vm2012, 1e+30, %v1982
        %v2020 = vsel %vm2013, 1e+30, %v1983
        %v2021 = vsel %vm2013, 1e+30, %v1984
        %v2022 = vmin.f32 %v2014, %v2018
        %v2023 = vmin.f32 %v2016, %v2020
        %v2024 = vmin.f32 %v2022, %v2023
        %v2025 = vrot.slane %v2024, 4
        %v2026 = vmin.f32 %v2024, %v2025
        %v2027 = vrot.slane %v2026, 2
        %v2028 = vmin.f32 %v2026, %v2027
        %v2029 = vrot.slane %v2028, 1
        %v2030 = vmin.f32 %v2028, %v2029
        %v2031 = vmin.f32 %v2015, %v2019
        %v2032 = vmin.f32 %v2017, %v2021
        %v2033 = vmin.f32 %v2031, %v2032
        %v2034 = vrot.slane %v2033, 4
        %v2035 = vmin.f32 %v2033, %v2034
        %v2036 = vrot.slane %v2035, 2
        %v2037 = vmin.f32 %v2035, %v2036
        %v2038 = vrot.slane %v2037, 1
        %v2039 = vmin.f32 %v2037, %v2038
        %v2040 = vmin.f32 %v1802, %v2030
        %v2041 = vmin.f32 %v1803, %v2039
        %v2042 = vsel %vm2010, %v1977, 1e+30
        %v2043 = vsel %vm2010, %v1978, 1e+30
        %v2044 = vsel %vm2011, %v1979, 1e+30
        %v2045 = vsel %vm2011, %v1980, 1e+30
        %v2046 = vsel %vm2012, %v1981, 1e+30
        %v2047 = vsel %vm2012, %v1982, 1e+30
        %v2048 = vsel %vm2013, %v1983, 1e+30
        %v2049 = vsel %vm2013, %v1984, 1e+30
        %v2050 = vmin.f32 %v2042, %v2046
        %v2051 = vmin.f32 %v2044, %v2048
        %v2052 = vmin.f32 %v2050, %v2051
        %v2053 = vrot.slane %v2052, 4
        %v2054 = vmin.f32 %v2052, %v2053
        %v2055 = vrot.slane %v2054, 2
        %v2056 = vmin.f32 %v2054, %v2055
        %v2057 = vrot.slane %v2056, 1
        %v2058 = vmin.f32 %v2056, %v2057
        %v2059 = vmin.f32 %v2043, %v2047
        %v2060 = vmin.f32 %v2045, %v2049
        %v2061 = vmin.f32 %v2059, %v2060
        %v2062 = vrot.slane %v2061, 4
        %v2063 = vmin.f32 %v2061, %v2062
        %v2064 = vrot.slane %v2063, 2
        %v2065 = vmin.f32 %v2063, %v2064
        %v2066 = vrot.slane %v2065, 1
        %v2067 = vmin.f32 %v2065, %v2066
        %v2068 = vmin.f32 %v1830, %v2058
        %v2069 = vmin.f32 %v1831, %v2067
        %2070 = vset.pattern.permute.xlu0 1
        %2071 = vperm.xlu0 %2070, %v1994
        %v2072 = vpop.permute.xlu0 %2071
        %2073 = vset.pattern.permute.xlu0 1
        %2074 = vperm.xlu0 %2073, %v1995
        %v2075 = vpop.permute.xlu0 %2074
        %2076 = vset.pattern.permute.xlu0 1
        %2077 = vperm.xlu0 %2076, %v1996
        %v2078 = vpop.permute.xlu0 %2077
        %2079 = vset.pattern.permute.xlu0 1
        %2080 = vperm.xlu0 %2079, %v1997
        %v2081 = vpop.permute.xlu0 %2080
        %vm2082 = vcmp.eq.s32.totalorder %v2072, 1
        %vm2083 = vcmp.eq.s32.totalorder %v2075, 1
        %vm2084 = vcmp.eq.s32.totalorder %v2078, 1
        %vm2085 = vcmp.eq.s32.totalorder %v2081, 1
        %v2086 = vsel %vm2082, 1e+30, %v1977
        %v2087 = vsel %vm2082, 1e+30, %v1978
        %v2088 = vsel %vm2083, 1e+30, %v1979
        %v2089 = vsel %vm2083, 1e+30, %v1980
        %v2090 = vsel %vm2084, 1e+30, %v1981
        %v2091 = vsel %vm2084, 1e+30, %v1982
        %v2092 = vsel %vm2085, 1e+30, %v1983
        %v2093 = vsel %vm2085, 1e+30, %v1984
        %v2094 = vmin.f32 %v2086, %v2090
        %v2095 = vmin.f32 %v2088, %v2092
        %v2096 = vmin.f32 %v2094, %v2095
        %v2097 = vrot.slane %v2096, 4
        %v2098 = vmin.f32 %v2096, %v2097
        %v2099 = vrot.slane %v2098, 2
        %v2100 = vmin.f32 %v2098, %v2099
        %v2101 = vrot.slane %v2100, 1
        %v2102 = vmin.f32 %v2100, %v2101
        %v2103 = vmin.f32 %v2087, %v2091
        %v2104 = vmin.f32 %v2089, %v2093
        %v2105 = vmin.f32 %v2103, %v2104
        %v2106 = vrot.slane %v2105, 4
        %v2107 = vmin.f32 %v2105, %v2106
        %v2108 = vrot.slane %v2107, 2
        %v2109 = vmin.f32 %v2107, %v2108
        %v2110 = vrot.slane %v2109, 1
        %v2111 = vmin.f32 %v2109, %v2110
        %v2112 = vmin.f32 %v1874, %v2102
        %v2113 = vmin.f32 %v1875, %v2111
        %v2114 = vsel %vm2082, %v1977, 1e+30
        %v2115 = vsel %vm2082, %v1978, 1e+30
        %v2116 = vsel %vm2083, %v1979, 1e+30
        %v2117 = vsel %vm2083, %v1980, 1e+30
        %v2118 = vsel %vm2084, %v1981, 1e+30
        %v2119 = vsel %vm2084, %v1982, 1e+30
        %v2120 = vsel %vm2085, %v1983, 1e+30
        %v2121 = vsel %vm2085, %v1984, 1e+30
        %v2122 = vmin.f32 %v2114, %v2118
        %v2123 = vmin.f32 %v2116, %v2120
        %v2124 = vmin.f32 %v2122, %v2123
        %v2125 = vrot.slane %v2124, 4
        %v2126 = vmin.f32 %v2124, %v2125
        %v2127 = vrot.slane %v2126, 2
        %v2128 = vmin.f32 %v2126, %v2127
        %v2129 = vrot.slane %v2128, 1
        %v2130 = vmin.f32 %v2128, %v2129
        %v2131 = vmin.f32 %v2115, %v2119
        %v2132 = vmin.f32 %v2117, %v2121
        %v2133 = vmin.f32 %v2131, %v2132
        %v2134 = vrot.slane %v2133, 4
        %v2135 = vmin.f32 %v2133, %v2134
        %v2136 = vrot.slane %v2135, 2
        %v2137 = vmin.f32 %v2135, %v2136
        %v2138 = vrot.slane %v2137, 1
        %v2139 = vmin.f32 %v2137, %v2138
        %v2140 = vmin.f32 %v1902, %v2130
        %v2141 = vmin.f32 %v1903, %v2139
        %v2142 = vld [vmem:[%s209] sm:$0xf]
        %vm2143 = vcmp.ge.f32.partialorder %v2040, 1e+30
        %vm2144 = vcmp.ge.f32.partialorder %v2041, 1e+30
        %v2145 = vsel %vm2143, 0.0, %v2040
        %v2146 = vsel %vm2144, 0.0, %v2041
        %vm2147 = vcmp.ge.f32.partialorder %v2068, 1e+30
        %vm2148 = vcmp.ge.f32.partialorder %v2069, 1e+30
        %v2149 = vsel %vm2147, 0.0, %v2068
        %v2150 = vsel %vm2148, 0.0, %v2069
        %vm2151 = vcmp.ge.f32.partialorder %v2112, 1e+30
        %vm2152 = vcmp.ge.f32.partialorder %v2113, 1e+30
        %v2153 = vsel %vm2151, 0.0, %v2112
        %v2154 = vsel %vm2152, 0.0, %v2113
        %vm2155 = vcmp.ge.f32.partialorder %v2140, 1e+30
        %vm2156 = vcmp.ge.f32.partialorder %v2141, 1e+30
        %v2157 = vsel %vm2155, 0.0, %v2140
        %v2158 = vsel %vm2156, 0.0, %v2141
        %v2159 = vadd.f32 %v2145, %v2149
        %v2160 = vadd.f32 %v2146, %v2150
        %v2161 = vmul.f32 %v2145, %v2149
        %v2162 = vmul.f32 %v2146, %v2150
        %v2163 = vrsqrt.pop %v2161
        %v2164 = vmul.f32 %v2161, %v2163
        %vm2165 = vcmp.eq.f32.partialorder %v2161, inf
        %v2166 = vsel %vm2165, %v2161, %v2164
        %vm2167 = vcmp.eq.f32.partialorder %v2161, 0.0
        %v2168 = vand.u32 %v2161, 2147483648
        %v2169 = vsel %vm2167, %v2168, %v2166
        %v2170 = vrsqrt.pop %v2162
        %v2171 = vmul.f32 %v2162, %v2170
        %vm2172 = vcmp.eq.f32.partialorder %v2162, inf
        %v2173 = vsel %vm2172, %v2162, %v2171
        %vm2174 = vcmp.eq.f32.partialorder %v2162, 0.0
        %v2175 = vand.u32 %v2162, 2147483648
        %v2176 = vsel %vm2174, %v2175, %v2173
        %v2177 = vmul.f32 %v2169, 2.0
        %v2178 = vmul.f32 %v2176, 2.0
        %v2179 = vadd.f32 %v2159, %v2177
        %v2180 = vadd.f32 %v2160, %v2178
        %v2181 = vadd.f32 %v2153, %v2157
        %v2182 = vadd.f32 %v2154, %v2158
        %v2183 = vmul.f32 %v2153, %v2157
        %v2184 = vmul.f32 %v2154, %v2158
        %v2185 = vrsqrt.pop %v2183
        %v2186 = vmul.f32 %v2183, %v2185
        %vm2187 = vcmp.eq.f32.partialorder %v2183, inf
        %v2188 = vsel %vm2187, %v2183, %v2186
        %vm2189 = vcmp.eq.f32.partialorder %v2183, 0.0
        %v2190 = vand.u32 %v2183, 2147483648
        %v2191 = vsel %vm2189, %v2190, %v2188
        %v2192 = vrsqrt.pop %v2184
        %v2193 = vmul.f32 %v2184, %v2192
        %vm2194 = vcmp.eq.f32.partialorder %v2184, inf
        %v2195 = vsel %vm2194, %v2184, %v2193
        %vm2196 = vcmp.eq.f32.partialorder %v2184, 0.0
        %v2197 = vand.u32 %v2184, 2147483648
        %v2198 = vsel %vm2196, %v2197, %v2195
        %v2199 = vmul.f32 %v2191, 2.0
        %v2200 = vmul.f32 %v2198, 2.0
        %v2201 = vadd.f32 %v2181, %v2199
        %v2202 = vadd.f32 %v2182, %v2200
        %v2204 = vrot.slane %v2142, 7
        %v2205 = vrot.slane %v2204, 2
        %v2207 = vsub.f32 %v2142, %v2205
        %v2208 = vmul.f32 %v2207, %v2207
        %v2209 = vadd.f32 %v2179, %v2201
        %v2210 = vadd.f32 %v2180, %v2202
        %v2213 = vcombine.low %v2209, %v2210
        %v2215 = vunpack.c.l.s4 1983009808
        %v2216 = vunpack.c.0.s8 %v2215
        %v2217 = vlaneseq
        %v2218 = vshrl.u32 %v2217, 7
        %v2219 = vsub.s32 %v2216, %v2218
        %v2220 = vrot.slane %v2213, %v2219
        %v2222 = vmul.f32 %v2208, %v2220
        %v2224 = vlaneseq
        %v2225 = vshrl.u32 %v2224, 7
        %v2226 = vsub.s32 0, %v2225
        %v2227 = vrot.slane %v2222, %v2226
        %v2228 = vlaneseq
        %v2229 = vshrl.u32 %v2228, 7
        %v2230 = vsub.s32 2, %v2229
        %v2231 = vrot.slane %v2222, %v2230
        %vm2234 = vcmask 1040384
        %v2235 = vsel %vm2234, %v2227, 0.0
        %v2236 = vsel %vm2234, %v2231, 0.0
        %v2237 = vadd.f32 %v2235, %v2236
        %2238 = vadd.xlane.f32.xlu0 %v2237
        %v2239 = vpop.xlane.xlu0 %2238
        %v2240 = vrot.slane %v2239, 4
        %v2241 = vadd.f32 %v2239, %v2240
        %v2242 = vrot.slane %v2241, 2
        %v2243 = vadd.f32 %v2241, %v2242
        %v2244 = vrot.slane %v2243, 1
        %v2245 = vadd.f32 %v2243, %v2244
        %s2246 = vtos %v2245
        %s2247 = sadd.f32 %s2246, 0.0
        %v2248 = vstv %s2247
        %2249 = vst [vmem:[%s204] sm:$0x1] %v2248
        %s2250 = sand.u32 %s120, 1
        %s2251 = scalar_lea.sflag [#allocation3], %s2250
        %s2252 = sand.u32 %s120, 1
        %s2253 = scalar_lea.vmem [#allocation2], %s2252
        // Predicated region
        $region37: #{tpu_custom_call.1} parent=35 // pred_check
          %p2254 = pneg %p130
        $region38: #{tpu_custom_call.1} parent=35 // pred_check_branch
          %2256 = sbr.rel (%p2254) target = $region40
        $region39: #{tpu_custom_call.1} parent=35 // pred_region
          %s2258 = ssub.s32 16, 16
          %2259 = vsyncadd %s2251, %s2258
          %s2260 = smul.addr %s18, 16
          %s2261 = scalar_lea.hbm %s4, %s2260
          %s2263 = sshll.u32 %s2253, 4
          %s2264 = int_to_ptr.vmem [resolvable:$true] %s2263
          %2266 = dma.vmem_to_hbm [thread:$0]  %s2264, 16, %s2261, %s2251
        $region40: #{tpu_custom_call.1} parent=35 // pred_fallthru
          _
      $region36: #{tpu_custom_call.1} parent=5 // pred_fallthru
        _
      %p2267 = scmp.le.s32.totalorder 2, %s13
      // Predicated region
      $region41: #{tpu_custom_call.1} parent=5 // pred_check
        %p2268 = pneg %p2267
      $region42: #{tpu_custom_call.1} parent=5 // pred_check_branch
        %2270 = sbr.rel (%p2268) target = $region44
      $region43: #{tpu_custom_call.1} parent=5 // pred_region
        %s2271 = ssub.s32 %s13, 2
        // Predicated region
        $region45: #{tpu_custom_call.1} parent=43 // pred_check
          %p2272 = pneg %p136
        $region46: #{tpu_custom_call.1} parent=43 // pred_check_branch
          %2274 = sbr.rel (%p2272) target = $region48
        $region47: #{tpu_custom_call.1} parent=43 // pred_region
          %s2275 = sand.u32 %s121, 1
          %s2276 = scalar_lea.sflag [#allocation3], %s2275
          %s2277 = sand.u32 %s121, 1
          %s2278 = scalar_lea.vmem [#allocation2], %s2277
          %2279 = dma.done %s2276, 16
        $region48: #{tpu_custom_call.1} parent=43 // pred_fallthru
          _
      $region44: #{tpu_custom_call.1} parent=5 // pred_fallthru
        _
    $region6: #{tpu_custom_call.1} parent=1 // loop_footer
      %s17 = sadd.s32 1, %s13
    $region7: #{tpu_custom_call.1} parent=1 // loop_footer_branch
      %12 = sbr.rel target = $region3
    $region8: #{tpu_custom_call.1} parent=1 // loop_exit
      _
    %2280 = vsyncpa [#allocation3], 1
    %s2281 = scalar_lea.sflag [#allocation3], 1
    %2282 = vsyncpa %s2281, 1

</llo_original>
